<compile_context>
chip_gen: v6e
topology: v6e:2x2x1
jax: 0.10.0
libtpu: 0.0.40
codegen_flags: <defaults>
</compile_context>

<pallas_src>
import functools
import math

import numpy as np
import jax
import jax.numpy as jnp
from jax.experimental import pallas as pl
from jax.experimental.pallas import tpu as pltpu


PARAM_ORDER = ("qkvw", "qkvb", "ow", "f1w", "f1b", "f2w", "dpack")

# Row layout inside the packed per-layer f32 parameter array `dpack` (L, 8, D).
ROW_OB, ROW_LN1G, ROW_LN1B, ROW_F2B, ROW_LN2G, ROW_LN2B = 0, 1, 2, 3, 4, 5


# --------------------------- VMEM budgeting helpers ---------------------------

def _physical_vmem_bytes():
    try:
        return int(pltpu.get_tpu_info().vmem_capacity_bytes)
    except Exception:
        return 64 * 1024 * 1024  # conservative fallback (v7x per-TensorCore VMEM)


def _vmem_estimate_bytes(bb, S, D, F, H):
    """Rough per-grid-step VMEM footprint for one (batch-block, layer) step."""
    M = bb * S
    # Pipelined blocks are double-buffered by Pallas.
    weight_blk = 2 * (D * 3 * D + D * D + D * F + F * D)          # bf16 bytes
    small_blk = 4 * (3 * D + F + 8 * D)                           # f32 bias/LN bytes
    hidden_blk = 4 * M * D                                        # f32 hidden block
    pipelined = 2 * (weight_blk + small_blk + hidden_blk) + 2 * hidden_blk
    # Dominant in-kernel f32 intermediates (upper bound, live simultaneously).
    interm = 4 * (M * 3 * D                 # fused qkv
                  + 2 * bb * H * S * S      # attention scores s and p
                  + M * F                   # FFN hidden
                  + 5 * M * D)              # x, heads, attn, h1/h2 slack
    return pipelined + interm


def _pick_batch_block(B, S, D, F, H, max_bb=4):
    """Largest divisor of B (<= max_bb) whose estimated footprint fits VMEM,
    preferring to keep >= 2 blocks along the parallel batch axis (v7x megacore)."""
    cap = int(_physical_vmem_bytes() * 0.85)
    candidates = [bb for bb in range(1, min(B, max_bb) + 1) if B % bb == 0]
    fitting = [bb for bb in candidates
               if _vmem_estimate_bytes(bb, S, D, F, H) <= cap] or [1]
    pref = [bb for bb in fitting if B // bb >= 2]
    return max(pref) if pref else max(fitting)


# ----------------------------- Pallas kernel ---------------------------------

def encoder_stack_kernel(x_ref, qkvw_ref, qkvb_ref, ow_ref, f1w_ref, f1b_ref,
                         f2w_ref, dpk_ref, o_ref, *, num_heads, head_dim, eps):
    """Grid = (batch block b, layer l). Output block (b) is resident across l."""
    l = pl.program_id(1)
    bf16 = jnp.bfloat16
    f32 = jnp.float32

    # Layer 0: seed the resident hidden state from the embedded input.
    @pl.when(l == 0)
    def _():
        o_ref[...] = x_ref[...]

    xb3 = o_ref[...]                              # (Bb, S, D) f32, resident across l
    Bb, S, D = xb3.shape
    H, hd = num_heads, head_dim
    M = Bb * S
    scaling = float(head_dim) ** -0.5

    x = xb3.reshape(M, D)                         # matmul slab: amortizes MXU work
    x_b = x.astype(bf16)

    # Packed per-layer f32 params (static row slices of one DMA'd (8, D) tile).
    dpk = dpk_ref[0]                              # (8, D) f32
    ob = dpk[ROW_OB:ROW_OB + 1, :]
    ln1g = dpk[ROW_LN1G:ROW_LN1G + 1, :]
    ln1b = dpk[ROW_LN1B:ROW_LN1B + 1, :]
    f2b = dpk[ROW_F2B:ROW_F2B + 1, :]
    ln2g = dpk[ROW_LN2G:ROW_LN2G + 1, :]
    ln2b = dpk[ROW_LN2B:ROW_LN2B + 1, :]

    # --- self attention: fused QKV projection (one (M,D)x(D,3D) MXU issue) ---
    qkv = jnp.dot(x_b, qkvw_ref[0], preferred_element_type=f32) + qkvb_ref[0]
    q = qkv[:, 0 * D:1 * D] * scaling
    k = qkv[:, 1 * D:2 * D]
    v = qkv[:, 2 * D:3 * D]

    def to_heads(t):                              # (M, D) f32 -> (Bb*H, S, hd) bf16
        t4 = t.reshape(Bb, S, H, hd)
        return jnp.transpose(t4, (0, 2, 1, 3)).reshape(Bb * H, S, hd).astype(bf16)

    qh, kh, vh = to_heads(q), to_heads(k), to_heads(v)
    s = jnp.einsum('bqd,bkd->bqk', qh, kh,
                   preferred_element_type=f32)                   # (Bb*H, S, S) f32
    s = s - jnp.max(s, axis=-1, keepdims=True)                   # stable softmax (f32)
    p = jnp.exp(s)
    p = p * pl.reciprocal(jnp.sum(p, axis=-1, keepdims=True), approx=True)
    ctx = jnp.einsum('bqk,bkd->bqd', p.astype(bf16), vh,
                     preferred_element_type=f32)                 # (Bb*H, S, hd) f32

    attn = jnp.transpose(ctx.reshape(Bb, H, S, hd),
                         (0, 2, 1, 3)).reshape(M, D)             # merge heads
    attn = jnp.dot(attn.astype(bf16), ow_ref[0],
                   preferred_element_type=f32) + ob

    # residual + LayerNorm 1 (post-norm; eval mode -> dropout is identity), f32 math
    h1 = x + attn
    mu = jnp.mean(h1, axis=-1, keepdims=True)
    var = jnp.mean((h1 - mu) ** 2, axis=-1, keepdims=True)
    h1 = (h1 - mu) * jax.lax.rsqrt(var + eps) * ln1g + ln1b

    # --- feed forward (swish / SiLU activation) ---
    f = jnp.dot(h1.astype(bf16), f1w_ref[0],
                preferred_element_type=f32) + f1b_ref[0]
    f = f * jax.nn.sigmoid(f)
    f = jnp.dot(f.astype(bf16), f2w_ref[0],
                preferred_element_type=f32) + f2b

    # residual + LayerNorm 2
    h2 = h1 + f
    mu2 = jnp.mean(h2, axis=-1, keepdims=True)
    var2 = jnp.mean((h2 - mu2) ** 2, axis=-1, keepdims=True)
    out = (h2 - mu2) * jax.lax.rsqrt(var2 + eps) * ln2g + ln2b
    o_ref[...] = out.reshape(Bb, S, D)


def encoder_stack(x, params, num_heads, eps=1e-5, batch_block=None):
    """Run the full encoder layer stack in a single pallas_call.

    x: (B, S, D) f32; params: dict of stacked per-layer tensors (leading dim L).
    """
    B, S, D = x.shape
    L = params["qkvw"].shape[0]
    F = params["f1w"].shape[2]
    head_dim = D // num_heads

    bb = batch_block if batch_block is not None else _pick_batch_block(
        B, S, D, F, num_heads)
    assert B % bb == 0, f"batch {B} must be divisible by batch block {bb}"

    kernel = functools.partial(encoder_stack_kernel,
                               num_heads=num_heads, head_dim=head_dim, eps=eps)
    weights = [params[name] for name in PARAM_ORDER]

    in_specs = [pl.BlockSpec((bb, S, D), lambda b, l: (b, 0, 0))]   # hidden input
    for w in weights:                                               # per-layer blocks
        in_specs.append(pl.BlockSpec((1,) + w.shape[1:], lambda b, l: (l, 0, 0)))

    cap = int(_physical_vmem_bytes() * 0.85)
    vmem_limit = max(32 * 1024 * 1024,
                     min(int(_vmem_estimate_bytes(bb, S, D, F, num_heads) * 1.25),
                         cap))

    return pl.pallas_call(
        kernel,
        out_shape=jax.ShapeDtypeStruct((B, S, D), jnp.float32),
        grid=(B // bb, L),
        in_specs=in_specs,
        out_specs=pl.BlockSpec((bb, S, D), lambda b, l: (b, 0, 0)),
        compiler_params=pltpu.CompilerParams(
            dimension_semantics=("parallel", "arbitrary"),
            vmem_limit_bytes=vmem_limit),
    )(x, *weights)


# ------------------------------ JAX glue --------------------------------------

def sinusoidal_positions(n_pos, dim):
    """Marian sinusoidal positional embedding table (deterministic)."""
    position_enc = np.array(
        [[pos / np.power(10000.0, 2.0 * (j // 2) / dim) for j in range(dim)]
         for pos in range(n_pos)], dtype=np.float32)
    out = np.zeros((n_pos, dim), dtype=np.float32)
    half = dim // 2
    out[:, :half] = np.sin(position_enc[:, 0::2])
    out[:, half:] = np.cos(position_enc[:, 1::2])
    return jnp.asarray(out)


def init_params(key, num_layers, d_model, ffn_dim, vocab_size):
    """Deterministic synthetic weights (module __init__ only defines shapes).

    Weight matrices are stacked over layers and stored in bf16 (MXU-native,
    half the HBM->VMEM DMA bytes); biases / LayerNorm params stay f32 and are
    packed into a few arrays to minimize per-step DMA descriptors.
    """
    keys = jax.random.split(key, 11)
    embed = 0.02 * jax.random.normal(keys[0], (vocab_size, d_model), jnp.float32)
    s = 0.05
    L, D, F = num_layers, d_model, ffn_dim
    bf16 = jnp.bfloat16

    dpack = jnp.zeros((L, 8, D), jnp.float32)
    dpack = dpack.at[:, ROW_OB].set(0.02 * jax.random.normal(keys[7], (L, D)))
    dpack = dpack.at[:, ROW_LN1G].set(1.0)
    dpack = dpack.at[:, ROW_LN1B].set(0.02 * jax.random.normal(keys[8], (L, D)))
    dpack = dpack.at[:, ROW_F2B].set(0.02 * jax.random.normal(keys[9], (L, D)))
    dpack = dpack.at[:, ROW_LN2G].set(1.0)
    dpack = dpack.at[:, ROW_LN2B].set(0.02 * jax.random.normal(keys[10], (L, D)))

    params = {
        "qkvw": (s * jax.random.normal(keys[1], (L, D, 3 * D), jnp.float32)).astype(bf16),
        "ow": (s * jax.random.normal(keys[2], (L, D, D), jnp.float32)).astype(bf16),
        "f1w": (s * jax.random.normal(keys[3], (L, D, F), jnp.float32)).astype(bf16),
        "f2w": (s * jax.random.normal(keys[4], (L, F, D), jnp.float32)).astype(bf16),
        "qkvb": 0.02 * jax.random.normal(keys[5], (L, 1, 3 * D), jnp.float32),
        "f1b": 0.02 * jax.random.normal(keys[6], (L, 1, F), jnp.float32),
        "dpack": dpack,
    }
    return embed, params


def encoder_forward(input_ids, embed_table, pos_table, params, num_heads):
    """Returns the encoder's last hidden state [B, S, D] (== Encoder.forward)."""
    B, S = input_ids.shape
    d_model = embed_table.shape[1]
    embed_scale = math.sqrt(float(d_model))          # Marian: scale_embedding=True
    # Embedding gather + positional add stay in plain JAX (gather has no clean
    # rectangular-BlockSpec form); the per-layer hot path is Pallas.
    x = jnp.take(embed_table, input_ids, axis=0) * embed_scale
    x = x + pos_table[:S][None, :, :]
    # TODO(synk): padding attention_mask path omitted (forward called without a mask).
    return encoder_stack(x, params, num_heads)


def encoder_forward_ref(input_ids, embed_table, pos_table, params, num_heads,
                        eps=1e-5):
    """Pure-JAX f32 reference (same packed params, weights upcast to f32)."""
    B, S = input_ids.shape
    D = embed_table.shape[1]
    H = num_heads
    hd = D // H
    f32 = jnp.float32
    x = jnp.take(embed_table, input_ids, axis=0) * math.sqrt(float(D))
    x = x + pos_table[:S][None]
    L = params["qkvw"].shape[0]
    for layer in range(L):
        qkvw = params["qkvw"][layer].astype(f32)
        qkvb = params["qkvb"][layer]
        ow = params["ow"][layer].astype(f32)
        f1w = params["f1w"][layer].astype(f32)
        f1b = params["f1b"][layer]
        f2w = params["f2w"][layer].astype(f32)
        dp = params["dpack"][layer]
        ob, ln1g, ln1b = dp[ROW_OB], dp[ROW_LN1G], dp[ROW_LN1B]
        f2b, ln2g, ln2b = dp[ROW_F2B], dp[ROW_LN2G], dp[ROW_LN2B]

        qkv = x @ qkvw + qkvb
        q = qkv[..., 0 * D:1 * D] * (float(hd) ** -0.5)
        k = qkv[..., 1 * D:2 * D]
        v = qkv[..., 2 * D:3 * D]
        qh = q.reshape(B, S, H, hd).transpose(0, 2, 1, 3)
        kh = k.reshape(B, S, H, hd).transpose(0, 2, 1, 3)
        vh = v.reshape(B, S, H, hd).transpose(0, 2, 1, 3)
        sc = jnp.einsum('bhqd,bhkd->bhqk', qh, kh)
        p = jax.nn.softmax(sc, axis=-1)
        ctx = jnp.einsum('bhqk,bhkd->bhqd', p, vh)
        attn = ctx.transpose(0, 2, 1, 3).reshape(B, S, D) @ ow + ob

        h1 = x + attn
        mu = h1.mean(-1, keepdims=True)
        var = ((h1 - mu) ** 2).mean(-1, keepdims=True)
        h1 = (h1 - mu) / jnp.sqrt(var + eps) * ln1g + ln1b

        f = h1 @ f1w + f1b
        f = f * jax.nn.sigmoid(f)
        f = f @ f2w + f2b

        h2 = h1 + f
        mu = h2.mean(-1, keepdims=True)
        var = ((h2 - mu) ** 2).mean(-1, keepdims=True)
        x = (h2 - mu) / jnp.sqrt(var + eps) * ln2g + ln2b
    return x


# ------------------------------- main -----------------------------------------

if __name__ == "__main__":
    B, S = 2, 8
    D_MODEL, NUM_HEADS, FFN_DIM = 128, 4, 256
    NUM_LAYERS, VOCAB = 2, 50
    MAX_POS = 64

    key = jax.random.PRNGKey(0)
    k_ids, k_params = jax.random.split(key)

    input_ids = jax.random.randint(k_ids, (B, S), 0, VOCAB, dtype=jnp.int32)
    embed_table, params = init_params(k_params, NUM_LAYERS, D_MODEL, FFN_DIM, VOCAB)
    pos_table = sinusoidal_positions(MAX_POS, D_MODEL)

    out = encoder_forward(input_ids, embed_table, pos_table, params, NUM_HEADS)
    out = jax.block_until_ready(out)
    assert out.shape == (B, S, D_MODEL) and out.dtype == jnp.float32
    assert bool(jnp.all(jnp.isfinite(out)))

    # Loose-tolerance check vs. a pure-JAX f32 reference (kernel uses bf16 matmul
    # operands + approx softmax reciprocal, so exact match is not expected).
    ref = encoder_forward_ref(input_ids, embed_table, pos_table, params, NUM_HEADS)
    max_abs_diff = float(jnp.max(jnp.abs(out - ref)))
    assert max_abs_diff < 0.1, f"kernel/reference mismatch: {max_abs_diff}"

    print("KERNEL_OK")
</pallas_src>

<mosaic_0001>
module attributes {stable_mosaic.version = 11 : i64} {
  func.func @encoder_stack_kernel(%arg0: i32, %arg1: i32, %arg2: memref<1x8x128xf32, #tpu.memory_space<vmem>>, %arg3: memref<1x128x384xbf16, #tpu.memory_space<vmem>>, %arg4: memref<1x1x384xf32, #tpu.memory_space<vmem>>, %arg5: memref<1x128x128xbf16, #tpu.memory_space<vmem>>, %arg6: memref<1x128x256xbf16, #tpu.memory_space<vmem>>, %arg7: memref<1x1x256xf32, #tpu.memory_space<vmem>>, %arg8: memref<1x256x128xbf16, #tpu.memory_space<vmem>>, %arg9: memref<1x8x128xf32, #tpu.memory_space<vmem>>, %arg10: memref<1x8x128xf32, #tpu.memory_space<vmem>>) attributes {dimension_semantics = [#tpu.dimension_semantics<parallel>, #tpu.dimension_semantics<arbitrary>], iteration_bounds = array<i64: 2, 2>, scalar_prefetch = 0 : i64, scratch_operands = 0 : i64, tpu.core_type = #tpu.core_type<tc>, window_params = [{transform_indices = @transform_0, window_bounds = array<i64: 1, 8, 128>}, {transform_indices = @transform_1, window_bounds = array<i64: 1, 128, 384>}, {transform_indices = @transform_2, window_bounds = array<i64: 1, 1, 384>}, {transform_indices = @transform_3, window_bounds = array<i64: 1, 128, 128>}, {transform_indices = @transform_4, window_bounds = array<i64: 1, 128, 256>}, {transform_indices = @transform_5, window_bounds = array<i64: 1, 1, 256>}, {transform_indices = @transform_6, window_bounds = array<i64: 1, 256, 128>}, {transform_indices = @transform_7, window_bounds = array<i64: 1, 8, 128>}, {transform_indices = @transform_8, window_bounds = array<i64: 1, 8, 128>}]} {
    %c0_i32 = arith.constant 0 : i32
    %0 = arith.cmpi eq, %arg1, %c0_i32 : i32
    %1 = arith.extui %0 : i1 to i32
    %c0_i32_0 = arith.constant 0 : i32
    %2 = arith.cmpi ne, %1, %c0_i32_0 : i32
    scf.if %2 {
      %c0_46 = arith.constant 0 : index
      %c0_47 = arith.constant 0 : index
      %c0_48 = arith.constant 0 : index
      %128 = vector.load %arg2[%c0_46, %c0_47, %c0_48] : memref<1x8x128xf32, #tpu.memory_space<vmem>>, vector<1x8x128xf32>
      %c0_49 = arith.constant 0 : index
      %c0_50 = arith.constant 0 : index
      %c0_51 = arith.constant 0 : index
      %129 = vector.load %arg10[%c0_49, %c0_50, %c0_51] : memref<1x8x128xf32, #tpu.memory_space<vmem>>, vector<1x8x128xf32>
      tpu.vector_store %arg10[%c0_49, %c0_50, %c0_51], %128 {strides = array<i32>} : memref<1x8x128xf32, #tpu.memory_space<vmem>>, vector<1x8x128xf32>,
    } else {
    }
    %c0 = arith.constant 0 : index
    %c0_1 = arith.constant 0 : index
    %c0_2 = arith.constant 0 : index
    %3 = vector.load %arg10[%c0, %c0_1, %c0_2] : memref<1x8x128xf32, #tpu.memory_space<vmem>>, vector<1x8x128xf32>
    %4 = vector.shape_cast %3 : vector<1x8x128xf32> to vector<8x128xf32>
    %5 = arith.truncf %4 : vector<8x128xf32> to vector<8x128xbf16>
    %c0_3 = arith.constant 0 : index
    %c0_4 = arith.constant 0 : index
    %c0_5 = arith.constant 0 : index
    %6 = vector.load %arg9[%c0_3, %c0_4, %c0_5] : memref<1x8x128xf32, #tpu.memory_space<vmem>>, vector<1x8x128xf32>
    %7 = vector.shape_cast %6 : vector<1x8x128xf32> to vector<8x128xf32>
    %8 = vector.extract_strided_slice %7 {offsets = [0, 0], sizes = [1, 128], strides = [1, 1]} : vector<8x128xf32> to vector<1x128xf32>
    %9 = vector.extract_strided_slice %7 {offsets = [1, 0], sizes = [1, 128], strides = [1, 1]} : vector<8x128xf32> to vector<1x128xf32>
    %10 = vector.extract_strided_slice %7 {offsets = [2, 0], sizes = [1, 128], strides = [1, 1]} : vector<8x128xf32> to vector<1x128xf32>
    %11 = vector.extract_strided_slice %7 {offsets = [3, 0], sizes = [1, 128], strides = [1, 1]} : vector<8x128xf32> to vector<1x128xf32>
    %12 = vector.extract_strided_slice %7 {offsets = [4, 0], sizes = [1, 128], strides = [1, 1]} : vector<8x128xf32> to vector<1x128xf32>
    %13 = vector.extract_strided_slice %7 {offsets = [5, 0], sizes = [1, 128], strides = [1, 1]} : vector<8x128xf32> to vector<1x128xf32>
    %c0_6 = arith.constant 0 : index
    %c0_7 = arith.constant 0 : index
    %c0_8 = arith.constant 0 : index
    %14 = vector.load %arg3[%c0_6, %c0_7, %c0_8] : memref<1x128x384xbf16, #tpu.memory_space<vmem>>, vector<1x128x384xbf16>
    %15 = vector.shape_cast %14 : vector<1x128x384xbf16> to vector<128x384xbf16>
    %cst = arith.constant dense<0.000000e+00> : vector<8x384xf32>
    %16 = tpu.matmul %5, %15, %cst {dimension_numbers = #tpu.dot_dimension_numbers<[1], [0], [0], [1], [0, 0, 1, 1], [], []>} : vector<8x128xbf16>, vector<128x384xbf16>, vector<8x384xf32> -> vector<8x384xf32>
    %c0_9 = arith.constant 0 : index
    %c0_10 = arith.constant 0 : index
    %c0_11 = arith.constant 0 : index
    %17 = vector.load %arg4[%c0_9, %c0_10, %c0_11] : memref<1x1x384xf32, #tpu.memory_space<vmem>>, vector<1x1x384xf32>
    %18 = vector.shape_cast %17 : vector<1x1x384xf32> to vector<1x384xf32>
    %19 = vector.broadcast %18 : vector<1x384xf32> to vector<8x384xf32>
    %20 = arith.addf %16, %19 : vector<8x384xf32>
    %21 = vector.extract_strided_slice %20 {offsets = [0, 0], sizes = [8, 128], strides = [1, 1]} : vector<8x384xf32> to vector<8x128xf32>
    %cst_12 = arith.constant 0.176776692 : f32
    %22 = vector.broadcast %cst_12 : f32 to vector<8x128xf32>
    %23 = arith.mulf %21, %22 : vector<8x128xf32>
    %24 = vector.extract_strided_slice %20 {offsets = [0, 128], sizes = [8, 128], strides = [1, 1]} : vector<8x384xf32> to vector<8x128xf32>
    %25 = vector.extract_strided_slice %20 {offsets = [0, 256], sizes = [8, 128], strides = [1, 1]} : vector<8x384xf32> to vector<8x128xf32>
    %26 = vector.shape_cast %23 : vector<8x128xf32> to vector<1x8x4x32xf32>
    %27 = tpu.transpose %26, [0, 2, 1, 3] : vector<1x8x4x32xf32> -> vector<1x4x8x32xf32>
    %28 = vector.shape_cast %27 : vector<1x4x8x32xf32> to vector<4x8x32xf32>
    %29 = arith.truncf %28 : vector<4x8x32xf32> to vector<4x8x32xbf16>
    %30 = vector.shape_cast %24 : vector<8x128xf32> to vector<1x8x4x32xf32>
    %31 = tpu.transpose %30, [0, 2, 1, 3] : vector<1x8x4x32xf32> -> vector<1x4x8x32xf32>
    %32 = vector.shape_cast %31 : vector<1x4x8x32xf32> to vector<4x8x32xf32>
    %33 = arith.truncf %32 : vector<4x8x32xf32> to vector<4x8x32xbf16>
    %34 = vector.shape_cast %25 : vector<8x128xf32> to vector<1x8x4x32xf32>
    %35 = tpu.transpose %34, [0, 2, 1, 3] : vector<1x8x4x32xf32> -> vector<1x4x8x32xf32>
    %36 = vector.shape_cast %35 : vector<1x4x8x32xf32> to vector<4x8x32xf32>
    %37 = arith.truncf %36 : vector<4x8x32xf32> to vector<4x8x32xbf16>
    "tpu.trace_start"() <{level = 10 : i32, message = "bqd,bkd->bqk"}> : () -> ()
    %cst_13 = arith.constant dense<0.000000e+00> : vector<4x8x8xf32>
    %38 = tpu.matmul %29, %33, %cst_13 {dimension_numbers = #tpu.dot_dimension_numbers<[2], [2], [1], [1], [0, 0, 0, 1, 1, 1], [0], [0]>} : vector<4x8x32xbf16>, vector<4x8x32xbf16>, vector<4x8x8xf32> -> vector<4x8x8xf32>
    "tpu.trace_stop"() : () -> ()
    %cst_14 = arith.constant dense<0xFF800000> : vector<4x8xf32>
    %39 = vector.multi_reduction <maximumf>, %38, %cst_14 [2] : vector<4x8x8xf32> to vector<4x8xf32>
    %40 = vector.shape_cast %39 : vector<4x8xf32> to vector<4x8x1xf32>
    %41 = vector.broadcast %40 : vector<4x8x1xf32> to vector<4x8x8xf32>
    %42 = arith.subf %38, %41 : vector<4x8x8xf32>
    %43 = math.exp %42 : vector<4x8x8xf32>
    %cst_15 = arith.constant dense<0.000000e+00> : vector<4x8xf32>
    %44 = vector.multi_reduction <add>, %43, %cst_15 [2] : vector<4x8x8xf32> to vector<4x8xf32>
    %45 = vector.shape_cast %44 : vector<4x8xf32> to vector<4x8x1xf32>
    %46 = tpu.reciprocal %45 {approx = true} : vector<4x8x1xf32> -> vector<4x8x1xf32>
    %47 = vector.broadcast %46 : vector<4x8x1xf32> to vector<4x8x8xf32>
    %48 = arith.mulf %43, %47 : vector<4x8x8xf32>
    %49 = arith.truncf %48 : vector<4x8x8xf32> to vector<4x8x8xbf16>
    "tpu.trace_start"() <{level = 10 : i32, message = "bqk,bkd->bqd"}> : () -> ()
    %cst_16 = arith.constant dense<0.000000e+00> : vector<4x8x32xf32>
    %50 = tpu.matmul %49, %37, %cst_16 {dimension_numbers = #tpu.dot_dimension_numbers<[2], [1], [1], [2], [0, 0, 0, 1, 1, 2], [0], [0]>} : vector<4x8x8xbf16>, vector<4x8x32xbf16>, vector<4x8x32xf32> -> vector<4x8x32xf32>
    "tpu.trace_stop"() : () -> ()
    %51 = vector.shape_cast %50 : vector<4x8x32xf32> to vector<1x4x8x32xf32>
    %52 = tpu.transpose %51, [0, 2, 1, 3] : vector<1x4x8x32xf32> -> vector<1x8x4x32xf32>
    %53 = vector.shape_cast %52 : vector<1x8x4x32xf32> to vector<8x128xf32>
    %54 = arith.truncf %53 : vector<8x128xf32> to vector<8x128xbf16>
    %c0_17 = arith.constant 0 : index
    %c0_18 = arith.constant 0 : index
    %c0_19 = arith.constant 0 : index
    %55 = vector.load %arg5[%c0_17, %c0_18, %c0_19] : memref<1x128x128xbf16, #tpu.memory_space<vmem>>, vector<1x128x128xbf16>
    %56 = vector.shape_cast %55 : vector<1x128x128xbf16> to vector<128x128xbf16>
    %cst_20 = arith.constant dense<0.000000e+00> : vector<8x128xf32>
    %57 = tpu.matmul %54, %56, %cst_20 {dimension_numbers = #tpu.dot_dimension_numbers<[1], [0], [0], [1], [0, 0, 1, 1], [], []>} : vector<8x128xbf16>, vector<128x128xbf16>, vector<8x128xf32> -> vector<8x128xf32>
    %58 = vector.broadcast %8 : vector<1x128xf32> to vector<8x128xf32>
    %59 = arith.addf %57, %58 : vector<8x128xf32>
    %60 = arith.addf %4, %59 : vector<8x128xf32>
    %cst_21 = arith.constant dense<0.000000e+00> : vector<8xf32>
    %61 = vector.multi_reduction <add>, %60, %cst_21 [1] : vector<8x128xf32> to vector<8xf32>
    %62 = vector.shape_cast %61 : vector<8xf32> to vector<8x1xf32>
    %cst_22 = arith.constant 1.280000e+02 : f32
    %63 = vector.broadcast %cst_22 : f32 to vector<8x1xf32>
    %64 = arith.divf %62, %63 : vector<8x1xf32>
    %65 = vector.broadcast %64 : vector<8x1xf32> to vector<8x128xf32>
    %66 = arith.subf %60, %65 : vector<8x128xf32>
    %67 = arith.mulf %66, %66 : vector<8x128xf32>
    %cst_23 = arith.constant dense<0.000000e+00> : vector<8xf32>
    %68 = vector.multi_reduction <add>, %67, %cst_23 [1] : vector<8x128xf32> to vector<8xf32>
    %69 = vector.shape_cast %68 : vector<8xf32> to vector<8x1xf32>
    %cst_24 = arith.constant 1.280000e+02 : f32
    %70 = vector.broadcast %cst_24 : f32 to vector<8x1xf32>
    %71 = arith.divf %69, %70 : vector<8x1xf32>
    %72 = vector.broadcast %64 : vector<8x1xf32> to vector<8x128xf32>
    %73 = arith.subf %60, %72 : vector<8x128xf32>
    %cst_25 = arith.constant 9.99999974E-6 : f32
    %74 = vector.broadcast %cst_25 : f32 to vector<8x1xf32>
    %75 = arith.addf %71, %74 : vector<8x1xf32>
    %76 = math.rsqrt %75 : vector<8x1xf32>
    %77 = vector.broadcast %76 : vector<8x1xf32> to vector<8x128xf32>
    %78 = arith.mulf %73, %77 : vector<8x128xf32>
    %79 = vector.broadcast %9 : vector<1x128xf32> to vector<8x128xf32>
    %80 = arith.mulf %78, %79 : vector<8x128xf32>
    %81 = vector.broadcast %10 : vector<1x128xf32> to vector<8x128xf32>
    %82 = arith.addf %80, %81 : vector<8x128xf32>
    %83 = arith.truncf %82 : vector<8x128xf32> to vector<8x128xbf16>
    %c0_26 = arith.constant 0 : index
    %c0_27 = arith.constant 0 : index
    %c0_28 = arith.constant 0 : index
    %84 = vector.load %arg6[%c0_26, %c0_27, %c0_28] : memref<1x128x256xbf16, #tpu.memory_space<vmem>>, vector<1x128x256xbf16>
    %85 = vector.shape_cast %84 : vector<1x128x256xbf16> to vector<128x256xbf16>
    %cst_29 = arith.constant dense<0.000000e+00> : vector<8x256xf32>
    %86 = tpu.matmul %83, %85, %cst_29 {dimension_numbers = #tpu.dot_dimension_numbers<[1], [0], [0], [1], [0, 0, 1, 1], [], []>} : vector<8x128xbf16>, vector<128x256xbf16>, vector<8x256xf32> -> vector<8x256xf32>
    %c0_30 = arith.constant 0 : index
    %c0_31 = arith.constant 0 : index
    %c0_32 = arith.constant 0 : index
    %87 = vector.load %arg7[%c0_30, %c0_31, %c0_32] : memref<1x1x256xf32, #tpu.memory_space<vmem>>, vector<1x1x256xf32>
    %88 = vector.shape_cast %87 : vector<1x1x256xf32> to vector<1x256xf32>
    %89 = vector.broadcast %88 : vector<1x256xf32> to vector<8x256xf32>
    %90 = arith.addf %86, %89 : vector<8x256xf32>
    %91 = arith.negf %90 : vector<8x256xf32>
    %92 = math.exp %91 : vector<8x256xf32>
    %cst_33 = arith.constant 1.000000e+00 : f32
    %93 = vector.broadcast %cst_33 : f32 to vector<8x256xf32>
    %94 = arith.addf %93, %92 : vector<8x256xf32>
    %95 = arith.divf %93, %94 : vector<8x256xf32>
    %96 = arith.mulf %90, %95 : vector<8x256xf32>
    %97 = arith.truncf %96 : vector<8x256xf32> to vector<8x256xbf16>
    %c0_34 = arith.constant 0 : index
    %c0_35 = arith.constant 0 : index
    %c0_36 = arith.constant 0 : index
    %98 = vector.load %arg8[%c0_34, %c0_35, %c0_36] : memref<1x256x128xbf16, #tpu.memory_space<vmem>>, vector<1x256x128xbf16>
    %99 = vector.shape_cast %98 : vector<1x256x128xbf16> to vector<256x128xbf16>
    %cst_37 = arith.constant dense<0.000000e+00> : vector<8x128xf32>
    %100 = tpu.matmul %97, %99, %cst_37 {dimension_numbers = #tpu.dot_dimension_numbers<[1], [0], [0], [1], [0, 0, 1, 1], [], []>} : vector<8x256xbf16>, vector<256x128xbf16>, vector<8x128xf32> -> vector<8x128xf32>
    %101 = vector.broadcast %11 : vector<1x128xf32> to vector<8x128xf32>
    %102 = arith.addf %100, %101 : vector<8x128xf32>
    %103 = arith.addf %82, %102 : vector<8x128xf32>
    %cst_38 = arith.constant dense<0.000000e+00> : vector<8xf32>
    %104 = vector.multi_reduction <add>, %103, %cst_38 [1] : vector<8x128xf32> to vector<8xf32>
    %105 = vector.shape_cast %104 : vector<8xf32> to vector<8x1xf32>
    %cst_39 = arith.constant 1.280000e+02 : f32
    %106 = vector.broadcast %cst_39 : f32 to vector<8x1xf32>
    %107 = arith.divf %105, %106 : vector<8x1xf32>
    %108 = vector.broadcast %107 : vector<8x1xf32> to vector<8x128xf32>
    %109 = arith.subf %103, %108 : vector<8x128xf32>
    %110 = arith.mulf %109, %109 : vector<8x128xf32>
    %cst_40 = arith.constant dense<0.000000e+00> : vector<8xf32>
    %111 = vector.multi_reduction <add>, %110, %cst_40 [1] : vector<8x128xf32> to vector<8xf32>
    %112 = vector.shape_cast %111 : vector<8xf32> to vector<8x1xf32>
    %cst_41 = arith.constant 1.280000e+02 : f32
    %113 = vector.broadcast %cst_41 : f32 to vector<8x1xf32>
    %114 = arith.divf %112, %113 : vector<8x1xf32>
    %115 = vector.broadcast %107 : vector<8x1xf32> to vector<8x128xf32>
    %116 = arith.subf %103, %115 : vector<8x128xf32>
    %cst_42 = arith.constant 9.99999974E-6 : f32
    %117 = vector.broadcast %cst_42 : f32 to vector<8x1xf32>
    %118 = arith.addf %114, %117 : vector<8x1xf32>
    %119 = math.rsqrt %118 : vector<8x1xf32>
    %120 = vector.broadcast %119 : vector<8x1xf32> to vector<8x128xf32>
    %121 = arith.mulf %116, %120 : vector<8x128xf32>
    %122 = vector.broadcast %12 : vector<1x128xf32> to vector<8x128xf32>
    %123 = arith.mulf %121, %122 : vector<8x128xf32>
    %124 = vector.broadcast %13 : vector<1x128xf32> to vector<8x128xf32>
    %125 = arith.addf %123, %124 : vector<8x128xf32>
    %126 = vector.shape_cast %125 : vector<8x128xf32> to vector<1x8x128xf32>
    %c0_43 = arith.constant 0 : index
    %c0_44 = arith.constant 0 : index
    %c0_45 = arith.constant 0 : index
    %127 = vector.load %arg10[%c0_43, %c0_44, %c0_45] : memref<1x8x128xf32, #tpu.memory_space<vmem>>, vector<1x8x128xf32>
    tpu.vector_store %arg10[%c0_43, %c0_44, %c0_45], %126 {strides = array<i32>} : memref<1x8x128xf32, #tpu.memory_space<vmem>>, vector<1x8x128xf32>,
    return
  }
  func.func @transform_0(%arg0: i32, %arg1: i32) -> (i32, i32, i32) {
    %c0_i32 = arith.constant 0 : i32
    %c0_i32_0 = arith.constant 0 : i32
    %c0_i32_1 = arith.constant 0 : i32
    return %arg0, %c0_i32, %c0_i32_0 : i32, i32, i32
  }
  func.func @transform_1(%arg0: i32, %arg1: i32) -> (i32, i32, i32) {
    %c0_i32 = arith.constant 0 : i32
    %c0_i32_0 = arith.constant 0 : i32
    %c0_i32_1 = arith.constant 0 : i32
    return %arg1, %c0_i32, %c0_i32_0 : i32, i32, i32
  }
  func.func @transform_2(%arg0: i32, %arg1: i32) -> (i32, i32, i32) {
    %c0_i32 = arith.constant 0 : i32
    %c0_i32_0 = arith.constant 0 : i32
    %c0_i32_1 = arith.constant 0 : i32
    return %arg1, %c0_i32, %c0_i32_0 : i32, i32, i32
  }
  func.func @transform_3(%arg0: i32, %arg1: i32) -> (i32, i32, i32) {
    %c0_i32 = arith.constant 0 : i32
    %c0_i32_0 = arith.constant 0 : i32
    %c0_i32_1 = arith.constant 0 : i32
    return %arg1, %c0_i32, %c0_i32_0 : i32, i32, i32
  }
  func.func @transform_4(%arg0: i32, %arg1: i32) -> (i32, i32, i32) {
    %c0_i32 = arith.constant 0 : i32
    %c0_i32_0 = arith.constant 0 : i32
    %c0_i32_1 = arith.constant 0 : i32
    return %arg1, %c0_i32, %c0_i32_0 : i32, i32, i32
  }
  func.func @transform_5(%arg0: i32, %arg1: i32) -> (i32, i32, i32) {
    %c0_i32 = arith.constant 0 : i32
    %c0_i32_0 = arith.constant 0 : i32
    %c0_i32_1 = arith.constant 0 : i32
    return %arg1, %c0_i32, %c0_i32_0 : i32, i32, i32
  }
  func.func @transform_6(%arg0: i32, %arg1: i32) -> (i32, i32, i32) {
    %c0_i32 = arith.constant 0 : i32
    %c0_i32_0 = arith.constant 0 : i32
    %c0_i32_1 = arith.constant 0 : i32
    return %arg1, %c0_i32, %c0_i32_0 : i32, i32, i32
  }
  func.func @transform_7(%arg0: i32, %arg1: i32) -> (i32, i32, i32) {
    %c0_i32 = arith.constant 0 : i32
    %c0_i32_0 = arith.constant 0 : i32
    %c0_i32_1 = arith.constant 0 : i32
    return %arg1, %c0_i32, %c0_i32_0 : i32, i32, i32
  }
  func.func @transform_8(%arg0: i32, %arg1: i32) -> (i32, i32, i32) {
    %c0_i32 = arith.constant 0 : i32
    %c0_i32_0 = arith.constant 0 : i32
    %c0_i32_1 = arith.constant 0 : i32
    return %arg0, %c0_i32, %c0_i32_0 : i32, i32, i32
  }
}

</mosaic_0001>

<llo_original>
// kernel: tpu_custom_call.1
$region0: #{tpu_custom_call.1}
  #allocation0 [shape = 'u32[]', space=smem, size = 0x4, offset = 0x4, fixed_abs, tag = 'smem constant byte address 0x4 - core index']
  #allocation1 [shape = 'u32[144,128]{1,0:T(1,128)}', space=vmem, size = 0x12000, scoped, tag = 'internal scratch']
  %s0 = inlined_call_operand.hbm [shape: f32[2,8,128], index: 0, kind: input, shape index: {}]
  %s1 = inlined_call_operand.hbm [shape: bf16[2,128,384], index: 1, kind: input, shape index: {}]
  %s2 = inlined_call_operand.hbm [shape: f32[2,1,384], index: 2, kind: input, shape index: {}]
  %s3 = inlined_call_operand.hbm [shape: bf16[2,128,128], index: 3, kind: input, shape index: {}]
  %s4 = inlined_call_operand.hbm [shape: bf16[2,128,256], index: 4, kind: input, shape index: {}]
  %s5 = inlined_call_operand.vmem [shape: f32[2,1,256], index: 5, kind: input, shape index: {}]
  %s6 = inlined_call_operand.hbm [shape: bf16[2,256,128], index: 6, kind: input, shape index: {}]
  %s7 = inlined_call_operand.hbm [shape: f32[2,8,128], index: 7, kind: input, shape index: {}]
  %s8 = inlined_call_operand.hbm [shape: f32[2,8,128], index: 8, kind: output, shape index: {}]
  %s9 = sld [smem:[#allocation0]]
  $region97: #{tpu_custom_call.1} parent=0
    _
  %s11 = ssub.s32 1, %s9
  %s12 = scalar_select 0, %s11, %s9
  $region1: #{tpu_custom_call.1} parent=0
    #allocation2 [shape = 'u8[8192]{0}', space=vmem, size = 0x2000, scoped, tag = 'input window, operand 0']
    #allocation3 [shape = 's32[2]{0}', space=sflag, size = 0x8, scoped, tag = 'scoped memory for tpu_custom_call.1']
    #allocation4 [shape = 's32[2]{0}', space=sflag, size = 0x8, scoped, tag = 'scoped memory for tpu_custom_call.1']
    #allocation5 [shape = 'u8[196608]{0}', space=vmem, size = 0x30000, scoped, tag = 'input window, operand 1']
    #allocation6 [shape = 's32[2]{0}', space=sflag, size = 0x8, scoped, tag = 'scoped memory for tpu_custom_call.1']
    #allocation7 [shape = 'u8[3072]{0}', space=vmem, size = 0xc00, scoped, tag = 'input window, operand 2']
    #allocation8 [shape = 'u8[65536]{0}', space=vmem, size = 0x10000, scoped, tag = 'input window, operand 3']
    #allocation9 [shape = 's32[2]{0}', space=sflag, size = 0x8, scoped, tag = 'scoped memory for tpu_custom_call.1']
    #allocation10 [shape = 'u8[131072]{0}', space=vmem, size = 0x20000, scoped, tag = 'input window, operand 4']
    #allocation11 [shape = 'u8[131072]{0}', space=vmem, size = 0x20000, scoped, tag = 'input window, operand 6']
    #allocation12 [shape = 's32[2]{0}', space=sflag, size = 0x8, scoped, tag = 'scoped memory for tpu_custom_call.1']
    #allocation13 [shape = 'u8[8192]{0}', space=vmem, size = 0x2000, scoped, tag = 'input window, operand 7']
    #allocation14 [shape = 'u8[8192]{0}', space=vmem, size = 0x2000, scoped, tag = 'output window, operand 0']
    %13 = vsyncpa [#allocation3], 0
    %s14 = scalar_lea.sflag [#allocation3], 1
    %15 = vsyncpa %s14, 0
    %16 = vsyncpa [#allocation6], 0
    %s17 = scalar_lea.sflag [#allocation6], 1
    %18 = vsyncpa %s17, 0
    %19 = vsyncpa [#allocation9], 0
    %s20 = scalar_lea.sflag [#allocation9], 1
    %21 = vsyncpa %s20, 0
    %22 = vsyncpa [#allocation12], 0
    %s23 = scalar_lea.sflag [#allocation12], 1
    %24 = vsyncpa %s23, 0
    %25 = vsyncpa [#allocation4], 0
    %s26 = scalar_lea.sflag [#allocation4], 1
    %27 = vsyncpa %s26, 0
    loop: start=0, step=1, limit=6
    $region2: #{tpu_custom_call.1} parent=1 // loop_pre_header
      _
    $region3: #{tpu_custom_call.1} parent=1 // loop_header
      %s29 = sphi 0, %s33
      %p30 = scmp.ge.s32.totalorder %s29, 6
      %s36 = sphi 0, %s48
      %s37 = sphi 0, %s44
      %s38 = sphi 0, %s36
      %s39 = sphi 0, %s37
      %s40 = sphi 0, %s38
      %s41 = sphi 0, %s39
      %s51 = sphi 0, %s53
      %s54 = sphi 0, %s51
      %s55 = sphi 0, %s54
      %s71 = sphi 0, %s55
      %s77 = sphi 0, %s79
      %s80 = sphi 0, %s77
      %s81 = sphi 0, %s80
      %s97 = sphi 0, %s81
      %s103 = sphi 0, %s105
      %s106 = sphi 0, %s103
      %s107 = sphi 0, %s106
      %s123 = sphi 0, %s107
      %s129 = sphi 0, %s131
      %s132 = sphi 0, %s129
      %s133 = sphi 0, %s132
      %s149 = sphi 0, %s133
      %s155 = sphi 0, %s157
      %s158 = sphi 0, %s155
      %s159 = sphi 0, %s158
      %s175 = sphi 0, %s159
      %s181 = sphi 0, %s183
      %s184 = sphi 0, %s181
      %s185 = sphi 0, %s184
      %s201 = sphi 0, %s185
      %s207 = sphi 0, %s209
      %s210 = sphi 0, %s207
      %s211 = sphi 0, %s210
      %s227 = sphi 0, %s211
      %s233 = sphi 0, %s235
      %s236 = sphi 0, %s233
      %s237 = sphi 0, %s236
      %s253 = sphi 0, %s237
      %s259 = sphi 0, %s261
      %s262 = sphi 0, %s259
      %s263 = sphi 0, %s262
      %s279 = sphi 0, %s263
    $region4: #{tpu_custom_call.1} parent=1 // loop_header_branch
      %32 = sbr.rel (%p30) target = $region8
    $region5: #{tpu_custom_call.1} parent=1 // loop_body
      %s34 = ssub.s32 %s29, 1
      %s35 = ssub.s32 %s29, 2
      %s42 = sadd.s32 1, %s37
      %p43 = scmp.ge.s32.totalorder %s42, 2
      %s44 = scalar_select %p43, 0, %s42
      %s45 = sadd.s32 1, %s36
      %s46 = scalar_select %p43, %s45, %s36
      %p47 = scmp.ge.s32.totalorder %s46, 2
      %s48 = scalar_select %p47, 0, %s46
      %s49 = ssub.s32 %s36, %s48
      %p50 = scmp.eq.s32.totalorder %s49, 0
      %s52 = sadd.s32 %s51, 1
      %s53 = scalar_select %p50, %s51, %s52
      %p56 = pneg %p50
      %p57 = scmp.eq.s32.totalorder %s29, 3
      %p58 = por %p56, %p57
      %p59 = scmp.ne.s32.totalorder %s51, %s54
      %p60 = scmp.eq.s32.totalorder %s29, 0
      %p61 = por %p59, %p60
      %p62 = scmp.ne.s32.totalorder %s51, %s54
      %p63 = scmp.eq.s32.totalorder %s34, 3
      %p64 = por %p62, %p63
      %p65 = scmp.ne.s32.totalorder %s54, %s55
      %p66 = scmp.eq.s32.totalorder %s34, 0
      %p67 = por %p65, %p66
      %p68 = scmp.ne.s32.totalorder %s54, %s55
      %p69 = scmp.eq.s32.totalorder %s35, 3
      %p70 = por %p68, %p69
      %p72 = scmp.ne.s32.totalorder %s55, %s71
      %p73 = scmp.eq.s32.totalorder %s35, 0
      %p74 = por %p72, %p73
      %s75 = ssub.s32 %s37, %s44
      %p76 = scmp.eq.s32.totalorder %s75, 0
      %s78 = sadd.s32 %s77, 1
      %s79 = scalar_select %p76, %s77, %s78
      %p82 = pneg %p76
      %p83 = scmp.eq.s32.totalorder %s29, 3
      %p84 = por %p82, %p83
      %p85 = scmp.ne.s32.totalorder %s77, %s80
      %p86 = scmp.eq.s32.totalorder %s29, 0
      %p87 = por %p85, %p86
      %p88 = scmp.ne.s32.totalorder %s77, %s80
      %p89 = scmp.eq.s32.totalorder %s34, 3
      %p90 = por %p88, %p89
      %p91 = scmp.ne.s32.totalorder %s80, %s81
      %p92 = scmp.eq.s32.totalorder %s34, 0
      %p93 = por %p91, %p92
      %p94 = scmp.ne.s32.totalorder %s80, %s81
      %p95 = scmp.eq.s32.totalorder %s35, 3
      %p96 = por %p94, %p95
      %p98 = scmp.ne.s32.totalorder %s81, %s97
      %p99 = scmp.eq.s32.totalorder %s35, 0
      %p100 = por %p98, %p99
      %s101 = ssub.s32 %s37, %s44
      %p102 = scmp.eq.s32.totalorder %s101, 0
      %s104 = sadd.s32 %s103, 1
      %s105 = scalar_select %p102, %s103, %s104
      %p108 = pneg %p102
      %p109 = scmp.eq.s32.totalorder %s29, 3
      %p110 = por %p108, %p109
      %p111 = scmp.ne.s32.totalorder %s103, %s106
      %p112 = scmp.eq.s32.totalorder %s29, 0
      %p113 = por %p111, %p112
      %p114 = scmp.ne.s32.totalorder %s103, %s106
      %p115 = scmp.eq.s32.totalorder %s34, 3
      %p116 = por %p114, %p115
      %p117 = scmp.ne.s32.totalorder %s106, %s107
      %p118 = scmp.eq.s32.totalorder %s34, 0
      %p119 = por %p117, %p118
      %p120 = scmp.ne.s32.totalorder %s106, %s107
      %p121 = scmp.eq.s32.totalorder %s35, 3
      %p122 = por %p120, %p121
      %p124 = scmp.ne.s32.totalorder %s107, %s123
      %p125 = scmp.eq.s32.totalorder %s35, 0
      %p126 = por %p124, %p125
      %s127 = ssub.s32 %s37, %s44
      %p128 = scmp.eq.s32.totalorder %s127, 0
      %s130 = sadd.s32 %s129, 1
      %s131 = scalar_select %p128, %s129, %s130
      %p134 = pneg %p128
      %p135 = scmp.eq.s32.totalorder %s29, 3
      %p136 = por %p134, %p135
      %p137 = scmp.ne.s32.totalorder %s129, %s132
      %p138 = scmp.eq.s32.totalorder %s29, 0
      %p139 = por %p137, %p138
      %p140 = scmp.ne.s32.totalorder %s129, %s132
      %p141 = scmp.eq.s32.totalorder %s34, 3
      %p142 = por %p140, %p141
      %p143 = scmp.ne.s32.totalorder %s132, %s133
      %p144 = scmp.eq.s32.totalorder %s34, 0
      %p145 = por %p143, %p144
      %p146 = scmp.ne.s32.totalorder %s132, %s133
      %p147 = scmp.eq.s32.totalorder %s35, 3
      %p148 = por %p146, %p147
      %p150 = scmp.ne.s32.totalorder %s133, %s149
      %p151 = scmp.eq.s32.totalorder %s35, 0
      %p152 = por %p150, %p151
      %s153 = ssub.s32 %s37, %s44
      %p154 = scmp.eq.s32.totalorder %s153, 0
      %s156 = sadd.s32 %s155, 1
      %s157 = scalar_select %p154, %s155, %s156
      %p160 = pneg %p154
      %p161 = scmp.eq.s32.totalorder %s29, 3
      %p162 = por %p160, %p161
      %p163 = scmp.ne.s32.totalorder %s155, %s158
      %p164 = scmp.eq.s32.totalorder %s29, 0
      %p165 = por %p163, %p164
      %p166 = scmp.ne.s32.totalorder %s155, %s158
      %p167 = scmp.eq.s32.totalorder %s34, 3
      %p168 = por %p166, %p167
      %p169 = scmp.ne.s32.totalorder %s158, %s159
      %p170 = scmp.eq.s32.totalorder %s34, 0
      %p171 = por %p169, %p170
      %p172 = scmp.ne.s32.totalorder %s158, %s159
      %p173 = scmp.eq.s32.totalorder %s35, 3
      %p174 = por %p172, %p173
      %p176 = scmp.ne.s32.totalorder %s159, %s175
      %p177 = scmp.eq.s32.totalorder %s35, 0
      %p178 = por %p176, %p177
      %s179 = ssub.s32 %s37, %s44
      %p180 = scmp.eq.s32.totalorder %s179, 0
      %s182 = sadd.s32 %s181, 1
      %s183 = scalar_select %p180, %s181, %s182
      %p186 = pneg %p180
      %p187 = scmp.eq.s32.totalorder %s29, 3
      %p188 = por %p186, %p187
      %p189 = scmp.ne.s32.totalorder %s181, %s184
      %p190 = scmp.eq.s32.totalorder %s29, 0
      %p191 = por %p189, %p190
      %p192 = scmp.ne.s32.totalorder %s181, %s184
      %p193 = scmp.eq.s32.totalorder %s34, 3
      %p194 = por %p192, %p193
      %p195 = scmp.ne.s32.totalorder %s184, %s185
      %p196 = scmp.eq.s32.totalorder %s34, 0
      %p197 = por %p195, %p196
      %p198 = scmp.ne.s32.totalorder %s184, %s185
      %p199 = scmp.eq.s32.totalorder %s35, 3
      %p200 = por %p198, %p199
      %p202 = scmp.ne.s32.totalorder %s185, %s201
      %p203 = scmp.eq.s32.totalorder %s35, 0
      %p204 = por %p202, %p203
      %s205 = ssub.s32 %s37, %s44
      %p206 = scmp.eq.s32.totalorder %s205, 0
      %s208 = sadd.s32 %s207, 1
      %s209 = scalar_select %p206, %s207, %s208
      %p212 = pneg %p206
      %p213 = scmp.eq.s32.totalorder %s29, 3
      %p214 = por %p212, %p213
      %p215 = scmp.ne.s32.totalorder %s207, %s210
      %p216 = scmp.eq.s32.totalorder %s29, 0
      %p217 = por %p215, %p216
      %p218 = scmp.ne.s32.totalorder %s207, %s210
      %p219 = scmp.eq.s32.totalorder %s34, 3
      %p220 = por %p218, %p219
      %p221 = scmp.ne.s32.totalorder %s210, %s211
      %p222 = scmp.eq.s32.totalorder %s34, 0
      %p223 = por %p221, %p222
      %p224 = scmp.ne.s32.totalorder %s210, %s211
      %p225 = scmp.eq.s32.totalorder %s35, 3
      %p226 = por %p224, %p225
      %p228 = scmp.ne.s32.totalorder %s211, %s227
      %p229 = scmp.eq.s32.totalorder %s35, 0
      %p230 = por %p228, %p229
      %s231 = ssub.s32 %s37, %s44
      %p232 = scmp.eq.s32.totalorder %s231, 0
      %s234 = sadd.s32 %s233, 1
      %s235 = scalar_select %p232, %s233, %s234
      %p238 = pneg %p232
      %p239 = scmp.eq.s32.totalorder %s29, 3
      %p240 = por %p238, %p239
      %p241 = scmp.ne.s32.totalorder %s233, %s236
      %p242 = scmp.eq.s32.totalorder %s29, 0
      %p243 = por %p241, %p242
      %p244 = scmp.ne.s32.totalorder %s233, %s236
      %p245 = scmp.eq.s32.totalorder %s34, 3
      %p246 = por %p244, %p245
      %p247 = scmp.ne.s32.totalorder %s236, %s237
      %p248 = scmp.eq.s32.totalorder %s34, 0
      %p249 = por %p247, %p248
      %p250 = scmp.ne.s32.totalorder %s236, %s237
      %p251 = scmp.eq.s32.totalorder %s35, 3
      %p252 = por %p250, %p251
      %p254 = scmp.ne.s32.totalorder %s237, %s253
      %p255 = scmp.eq.s32.totalorder %s35, 0
      %p256 = por %p254, %p255
      %s257 = ssub.s32 %s36, %s48
      %p258 = scmp.eq.s32.totalorder %s257, 0
      %s260 = sadd.s32 %s259, 1
      %s261 = scalar_select %p258, %s259, %s260
      %p264 = pneg %p258
      %p265 = scmp.eq.s32.totalorder %s29, 3
      %p266 = por %p264, %p265
      %p267 = scmp.ne.s32.totalorder %s259, %s262
      %p268 = scmp.eq.s32.totalorder %s29, 0
      %p269 = por %p267, %p268
      %p270 = scmp.ne.s32.totalorder %s259, %s262
      %p271 = scmp.eq.s32.totalorder %s34, 3
      %p272 = por %p270, %p271
      %p273 = scmp.ne.s32.totalorder %s262, %s263
      %p274 = scmp.eq.s32.totalorder %s34, 0
      %p275 = por %p273, %p274
      %p276 = scmp.ne.s32.totalorder %s262, %s263
      %p277 = scmp.eq.s32.totalorder %s35, 3
      %p278 = por %p276, %p277
      %p280 = scmp.ne.s32.totalorder %s263, %s279
      %p281 = scmp.eq.s32.totalorder %s35, 0
      %p282 = por %p280, %p281
      %p283 = scmp.le.s32.totalorder 1, %s29
      %p284 = scmp.lt.s32.totalorder %s29, 5
      %p285 = pnand %p283, %p284
      %p286 = pneg %p285
      // Predicated region
      $region9: #{tpu_custom_call.1} parent=5 // pred_check
        _
      $region10: #{tpu_custom_call.1} parent=5 // pred_check_branch
        %288 = sbr.rel (%p285) target = $region12
      $region11: #{tpu_custom_call.1} parent=5 // pred_region
        %s289 = ssub.s32 %s29, 1
      $region12: #{tpu_custom_call.1} parent=5 // pred_fallthru
        _
      %p290 = scmp.lt.s32.totalorder %s29, 4
      // Predicated region
      $region13: #{tpu_custom_call.1} parent=5 // pred_check
        %p291 = pneg %p290
      $region14: #{tpu_custom_call.1} parent=5 // pred_check_branch
        %293 = sbr.rel (%p291) target = $region16
      $region15: #{tpu_custom_call.1} parent=5 // pred_region
        // Predicated region
        $region17: #{tpu_custom_call.1} parent=15 // pred_check
          %p294 = pneg %p61
        $region18: #{tpu_custom_call.1} parent=15 // pred_check_branch
          %296 = sbr.rel (%p294) target = $region20
        $region19: #{tpu_custom_call.1} parent=15 // pred_region
          %s297 = sand.u32 %s51, 1
          %s298 = scalar_lea.sflag [#allocation3], %s297
          %s299 = sand.u32 %s51, 1
          %s300 = smul.addr %s299, 8
          %s301 = scalar_lea.vmem [#allocation2], %s300
          %s303 = ssub.s32 128, 128
          %304 = vsyncadd %s298, %s303
          %s305 = smul.addr %s36, 128
          %s306 = scalar_lea.hbm %s0, %s305
          %s308 = sshll.u32 %s301, 4
          %s309 = int_to_ptr.vmem [resolvable:$true] %s308
          %311 = dma.hbm_to_vmem [thread:$0]  %s306, 128, %s309, %s298
        $region20: #{tpu_custom_call.1} parent=15 // pred_fallthru
          _
        // Predicated region
        $region21: #{tpu_custom_call.1} parent=15 // pred_check
          %p312 = pneg %p87
        $region22: #{tpu_custom_call.1} parent=15 // pred_check_branch
          %314 = sbr.rel (%p312) target = $region24
        $region23: #{tpu_custom_call.1} parent=15 // pred_region
          %s315 = sand.u32 %s29, 1
          %s316 = scalar_lea.sflag [#allocation6], %s315
          %s317 = sand.u32 %s77, 1
          %s318 = smul.addr %s317, 192
          %s319 = scalar_lea.vmem [#allocation5], %s318
          %s321 = ssub.s32 3072, 3072
          %322 = vsyncadd %s316, %s321
          %s323 = smul.addr %s37, 48
          %s324 = smul.addr %s323, 64
          %s325 = scalar_lea.hbm %s1, %s324
          %s326 = sshll.u32 %s319, 4
          %s327 = int_to_ptr.vmem [resolvable:$true] %s326
          %332 = dma.hbm_to_vmem [thread:$0]  %s325, 3072, %s327, %s316, 192, 192, 12
        $region24: #{tpu_custom_call.1} parent=15 // pred_fallthru
          _
        // Predicated region
        $region25: #{tpu_custom_call.1} parent=15 // pred_check
          %p333 = pneg %p113
        $region26: #{tpu_custom_call.1} parent=15 // pred_check_branch
          %335 = sbr.rel (%p333) target = $region28
        $region27: #{tpu_custom_call.1} parent=15 // pred_region
          %s336 = sand.u32 %s29, 1
          %s337 = scalar_lea.sflag [#allocation6], %s336
          %s338 = sand.u32 %s103, 1
          %s339 = smul.addr %s338, 3
          %s340 = scalar_lea.vmem [#allocation7], %s339
          %s342 = ssub.s32 48, 48
          %343 = vsyncadd %s337, %s342
          %s344 = smul.addr %s37, 3
          %s345 = smul.addr %s344, 16
          %s346 = scalar_lea.hbm %s2, %s345
          %s348 = sshll.u32 %s340, 4
          %s349 = int_to_ptr.vmem [resolvable:$true] %s348
          %351 = dma.hbm_to_vmem [thread:$0]  %s346, 48, %s349, %s337
        $region28: #{tpu_custom_call.1} parent=15 // pred_fallthru
          _
        // Predicated region
        $region29: #{tpu_custom_call.1} parent=15 // pred_check
          %p352 = pneg %p139
        $region30: #{tpu_custom_call.1} parent=15 // pred_check_branch
          %354 = sbr.rel (%p352) target = $region32
        $region31: #{tpu_custom_call.1} parent=15 // pred_region
          %s355 = sand.u32 %s29, 1
          %s356 = scalar_lea.sflag [#allocation9], %s355
          %s357 = sand.u32 %s129, 1
          %s358 = smul.addr %s357, 64
          %s359 = scalar_lea.vmem [#allocation8], %s358
          %s361 = ssub.s32 1024, 1024
          %362 = vsyncadd %s356, %s361
          %s363 = smul.addr %s37, 16
          %s364 = smul.addr %s363, 64
          %s365 = scalar_lea.hbm %s3, %s364
          %s366 = sshll.u32 %s359, 4
          %s367 = int_to_ptr.vmem [resolvable:$true] %s366
          %372 = dma.hbm_to_vmem [thread:$0]  %s365, 1024, %s367, %s356, 64, 64, 4
        $region32: #{tpu_custom_call.1} parent=15 // pred_fallthru
          _
        // Predicated region
        $region33: #{tpu_custom_call.1} parent=15 // pred_check
          %p373 = pneg %p165
        $region34: #{tpu_custom_call.1} parent=15 // pred_check_branch
          %375 = sbr.rel (%p373) target = $region36
        $region35: #{tpu_custom_call.1} parent=15 // pred_region
          %s376 = sand.u32 %s29, 1
          %s377 = scalar_lea.sflag [#allocation9], %s376
          %s378 = sand.u32 %s155, 1
          %s379 = smul.addr %s378, 128
          %s380 = scalar_lea.vmem [#allocation10], %s379
          %s382 = ssub.s32 2048, 2048
          %383 = vsyncadd %s377, %s382
          %s384 = smul.addr %s37, 32
          %s385 = smul.addr %s384, 64
          %s386 = scalar_lea.hbm %s4, %s385
          %s387 = sshll.u32 %s380, 4
          %s388 = int_to_ptr.vmem [resolvable:$true] %s387
          %393 = dma.hbm_to_vmem [thread:$0]  %s386, 2048, %s388, %s377, 128, 128, 8
        $region36: #{tpu_custom_call.1} parent=15 // pred_fallthru
          _
        // Predicated region
        $region37: #{tpu_custom_call.1} parent=15 // pred_check
          %p394 = pneg %p191
        $region38: #{tpu_custom_call.1} parent=15 // pred_check_branch
          %396 = sbr.rel (%p394) target = $region40
        $region39: #{tpu_custom_call.1} parent=15 // pred_region
          %p397 = scmp.lt.s32.totalorder %s37, 1
          %s398 = scalar_select %p397, %s37, 1
          %s399 = smul.addr %s398, 2
          %s400 = scalar_lea.vmem %s5, %s399
        $region40: #{tpu_custom_call.1} parent=15 // pred_fallthru
          _
        // Predicated region
        $region41: #{tpu_custom_call.1} parent=15 // pred_check
          %p401 = pneg %p217
        $region42: #{tpu_custom_call.1} parent=15 // pred_check_branch
          %403 = sbr.rel (%p401) target = $region44
        $region43: #{tpu_custom_call.1} parent=15 // pred_region
          %s404 = sand.u32 %s29, 1
          %s405 = scalar_lea.sflag [#allocation12], %s404
          %s406 = sand.u32 %s207, 1
          %s407 = smul.addr %s406, 128
          %s408 = scalar_lea.vmem [#allocation11], %s407
          %s410 = ssub.s32 2048, 2048
          %411 = vsyncadd %s405, %s410
          %s412 = smul.addr %s37, 32
          %s413 = smul.addr %s412, 64
          %s414 = scalar_lea.hbm %s6, %s413
          %s415 = sshll.u32 %s408, 4
          %s416 = int_to_ptr.vmem [resolvable:$true] %s415
          %421 = dma.hbm_to_vmem [thread:$0]  %s414, 2048, %s416, %s405, 64, 64, 4
        $region44: #{tpu_custom_call.1} parent=15 // pred_fallthru
          _
        // Predicated region
        $region45: #{tpu_custom_call.1} parent=15 // pred_check
          %p422 = pneg %p243
        $region46: #{tpu_custom_call.1} parent=15 // pred_check_branch
          %424 = sbr.rel (%p422) target = $region48
        $region47: #{tpu_custom_call.1} parent=15 // pred_region
          %s425 = sand.u32 %s29, 1
          %s426 = scalar_lea.sflag [#allocation12], %s425
          %s427 = sand.u32 %s233, 1
          %s428 = smul.addr %s427, 8
          %s429 = scalar_lea.vmem [#allocation13], %s428
          %s431 = ssub.s32 128, 128
          %432 = vsyncadd %s426, %s431
          %s433 = smul.addr %s37, 128
          %s434 = scalar_lea.hbm %s7, %s433
          %s436 = sshll.u32 %s429, 4
          %s437 = int_to_ptr.vmem [resolvable:$true] %s436
          %439 = dma.hbm_to_vmem [thread:$0]  %s434, 128, %s437, %s426
        $region48: #{tpu_custom_call.1} parent=15 // pred_fallthru
          _
      $region16: #{tpu_custom_call.1} parent=5 // pred_fallthru
        _
      %p440 = scmp.le.s32.totalorder 1, %s29
      %p441 = scmp.lt.s32.totalorder %s29, 5
      %p442 = pnand %p440, %p441
      %p443 = pneg %p442
      // Predicated region
      $region49: #{tpu_custom_call.1} parent=5 // pred_check
        _
      $region50: #{tpu_custom_call.1} parent=5 // pred_check_branch
        %445 = sbr.rel (%p442) target = $region52
      $region51: #{tpu_custom_call.1} parent=5 // pred_region
        %s446 = ssub.s32 %s29, 1
        %s447 = sand.u32 %s54, 1
        %s448 = scalar_lea.sflag [#allocation3], %s447
        %s449 = sand.u32 %s54, 1
        %s450 = smul.addr %s449, 8
        %s451 = scalar_lea.vmem [#allocation2], %s450
        // Predicated region
        $region53: #{tpu_custom_call.1} parent=51 // pred_check
          %p452 = pneg %p67
        $region54: #{tpu_custom_call.1} parent=51 // pred_check_branch
          %454 = sbr.rel (%p452) target = $region56
        $region55: #{tpu_custom_call.1} parent=51 // pred_region
          %455 = dma.done %s448, 128
        $region56: #{tpu_custom_call.1} parent=51 // pred_fallthru
          _
        %s456 = sand.u32 %s34, 1
        %s457 = scalar_lea.sflag [#allocation6], %s456
        %s458 = sand.u32 %s80, 1
        %s459 = smul.addr %s458, 192
        %s460 = scalar_lea.vmem [#allocation5], %s459
        // Predicated region
        $region57: #{tpu_custom_call.1} parent=51 // pred_check
          %p461 = pneg %p93
        $region58: #{tpu_custom_call.1} parent=51 // pred_check_branch
          %463 = sbr.rel (%p461) target = $region60
        $region59: #{tpu_custom_call.1} parent=51 // pred_region
          %464 = dma.done %s457, 3072
        $region60: #{tpu_custom_call.1} parent=51 // pred_fallthru
          _
        %s465 = sand.u32 %s34, 1
        %s466 = scalar_lea.sflag [#allocation6], %s465
        %s467 = sand.u32 %s106, 1
        %s468 = smul.addr %s467, 3
        %s469 = scalar_lea.vmem [#allocation7], %s468
        // Predicated region
        $region61: #{tpu_custom_call.1} parent=51 // pred_check
          %p470 = pneg %p119
        $region62: #{tpu_custom_call.1} parent=51 // pred_check_branch
          %472 = sbr.rel (%p470) target = $region64
        $region63: #{tpu_custom_call.1} parent=51 // pred_region
          %473 = dma.done %s466, 48
        $region64: #{tpu_custom_call.1} parent=51 // pred_fallthru
          _
        %s474 = sand.u32 %s34, 1
        %s475 = scalar_lea.sflag [#allocation9], %s474
        %s476 = sand.u32 %s132, 1
        %s477 = smul.addr %s476, 64
        %s478 = scalar_lea.vmem [#allocation8], %s477
        // Predicated region
        $region65: #{tpu_custom_call.1} parent=51 // pred_check
          %p479 = pneg %p145
        $region66: #{tpu_custom_call.1} parent=51 // pred_check_branch
          %481 = sbr.rel (%p479) target = $region68
        $region67: #{tpu_custom_call.1} parent=51 // pred_region
          %482 = dma.done %s475, 1024
        $region68: #{tpu_custom_call.1} parent=51 // pred_fallthru
          _
        %s483 = sand.u32 %s34, 1
        %s484 = scalar_lea.sflag [#allocation9], %s483
        %s485 = sand.u32 %s158, 1
        %s486 = smul.addr %s485, 128
        %s487 = scalar_lea.vmem [#allocation10], %s486
        // Predicated region
        $region69: #{tpu_custom_call.1} parent=51 // pred_check
          %p488 = pneg %p171
        $region70: #{tpu_custom_call.1} parent=51 // pred_check_branch
          %490 = sbr.rel (%p488) target = $region72
        $region71: #{tpu_custom_call.1} parent=51 // pred_region
          %491 = dma.done %s484, 2048
        $region72: #{tpu_custom_call.1} parent=51 // pred_fallthru
          _
        %s492 = sand.u32 %s34, 1
        %s493 = scalar_lea.sflag [#allocation12], %s492
        %s494 = sand.u32 %s210, 1
        %s495 = smul.addr %s494, 128
        %s496 = scalar_lea.vmem [#allocation11], %s495
        // Predicated region
        $region73: #{tpu_custom_call.1} parent=51 // pred_check
          %p497 = pneg %p223
        $region74: #{tpu_custom_call.1} parent=51 // pred_check_branch
          %499 = sbr.rel (%p497) target = $region76
        $region75: #{tpu_custom_call.1} parent=51 // pred_region
          %500 = dma.done %s493, 2048
        $region76: #{tpu_custom_call.1} parent=51 // pred_fallthru
          _
        %s501 = sand.u32 %s34, 1
        %s502 = scalar_lea.sflag [#allocation12], %s501
        %s503 = sand.u32 %s236, 1
        %s504 = smul.addr %s503, 8
        %s505 = scalar_lea.vmem [#allocation13], %s504
        // Predicated region
        $region77: #{tpu_custom_call.1} parent=51 // pred_check
          %p506 = pneg %p249
        $region78: #{tpu_custom_call.1} parent=51 // pred_check_branch
          %508 = sbr.rel (%p506) target = $region80
        $region79: #{tpu_custom_call.1} parent=51 // pred_region
          %509 = dma.done %s502, 128
        $region80: #{tpu_custom_call.1} parent=51 // pred_fallthru
          _
        %s510 = sand.u32 %s54, 1
        %s511 = scalar_lea.sflag [#allocation3], %s510
        %s512 = sand.u32 %s54, 1
        %s513 = smul.addr %s512, 8
        %s514 = scalar_lea.vmem [#allocation2], %s513
        %p515 = pneg %p67
        %p516 = pneg %p64
        %s517 = sand.u32 %s34, 1
        %s518 = scalar_lea.sflag [#allocation6], %s517
        %s519 = sand.u32 %s80, 1
        %s520 = smul.addr %s519, 192
        %s521 = scalar_lea.vmem [#allocation5], %s520
        %p522 = pneg %p93
        %p523 = pneg %p90
        %s524 = sand.u32 %s34, 1
        %s525 = scalar_lea.sflag [#allocation6], %s524
        %s526 = sand.u32 %s106, 1
        %s527 = smul.addr %s526, 3
        %s528 = scalar_lea.vmem [#allocation7], %s527
        %p529 = pneg %p119
        %p530 = pneg %p116
        %s531 = sand.u32 %s34, 1
        %s532 = scalar_lea.sflag [#allocation9], %s531
        %s533 = sand.u32 %s132, 1
        %s534 = smul.addr %s533, 64
        %s535 = scalar_lea.vmem [#allocation8], %s534
        %p536 = pneg %p145
        %p537 = pneg %p142
        %s538 = sand.u32 %s34, 1
        %s539 = scalar_lea.sflag [#allocation9], %s538
        %s540 = sand.u32 %s158, 1
        %s541 = smul.addr %s540, 128
        %s542 = scalar_lea.vmem [#allocation10], %s541
        %p543 = pneg %p171
        %p544 = pneg %p168
        %p545 = scmp.lt.s32.totalorder %s39, 1
        %s546 = scalar_select %p545, %s39, 1
        %s547 = smul.addr %s546, 2
        %s548 = scalar_lea.vmem %s5, %s547
        %p549 = pneg %p197
        %p550 = pneg %p194
        %s551 = sand.u32 %s34, 1
        %s552 = scalar_lea.sflag [#allocation12], %s551
        %s553 = sand.u32 %s210, 1
        %s554 = smul.addr %s553, 128
        %s555 = scalar_lea.vmem [#allocation11], %s554
        %p556 = pneg %p223
        %p557 = pneg %p220
        %s558 = sand.u32 %s34, 1
        %s559 = scalar_lea.sflag [#allocation12], %s558
        %s560 = sand.u32 %s236, 1
        %s561 = smul.addr %s560, 8
        %s562 = scalar_lea.vmem [#allocation13], %s561
        %p563 = pneg %p249
        %p564 = pneg %p246
        %p565 = pneg %p275
        %p566 = pneg %p272
        %s567 = sand.u32 %s262, 1
        %s568 = scalar_lea.sflag [#allocation4], %s567
        %s569 = sand.u32 %s262, 1
        %s570 = smul.addr %s569, 8
        %s571 = scalar_lea.vmem [#allocation14], %s570
        %p572 = scmp.lt.s32.totalorder %s39, 1
        %s573 = scalar_select %p572, %s39, 1
        %s574 = smul.addr %s573, 2
        %s575 = scalar_lea.vmem %s5, %s574
        %p577 = scmp.eq.s32.totalorder %s39, 0
        // Predicated region
        $region81: #{tpu_custom_call.1} parent=51 // pred_check
          %p578 = pneg %p577
        $region82: #{tpu_custom_call.1} parent=51 // pred_check_branch
          %580 = sbr.rel (%p578) target = $region84
        $region83: #{tpu_custom_call.1} parent=51 // pred_region
          %v581 = vld [vmem:[%s451] sm:$0xff]
          %582 = vst [vmem:[%s571] sm:$0xff] %v581
        $region84: #{tpu_custom_call.1} parent=51 // pred_fallthru
          _
        %v583 = vld [vmem:[%s571] sm:$0xff]
        %v584 = vpack.c.bf16 %v583, %v583
        %v585 = vld [vmem:[%s505] sm:$0xff]
        %v586 = vld [vmem:[%s460] sm:$0xff]
        %v587 = vld [vmem:[%s460 + $0x8] sm:$0xf]
        %v588 = vld [vmem:[%s460 + $0xc] sm:$0xff]
        %v589 = vld [vmem:[%s460 + $0x14] sm:$0xf]
        %v590 = vld [vmem:[%s460 + $0x18] sm:$0xff]
        %v591 = vld [vmem:[%s460 + $0x20] sm:$0xf]
        %v592 = vld [vmem:[%s460 + $0x24] sm:$0xff]
        %v593 = vld [vmem:[%s460 + $0x2c] sm:$0xf]
        %v594 = vld [vmem:[%s460 + $0x30] sm:$0xff]
        %v595 = vld [vmem:[%s460 + $0x38] sm:$0xf]
        %v596 = vld [vmem:[%s460 + $0x3c] sm:$0xff]
        %v597 = vld [vmem:[%s460 + $0x44] sm:$0xf]
        %v598 = vld [vmem:[%s460 + $0x48] sm:$0xff]
        %v599 = vld [vmem:[%s460 + $0x50] sm:$0xf]
        %v600 = vld [vmem:[%s460 + $0x54] sm:$0xff]
        %v601 = vld [vmem:[%s460 + $0x5c] sm:$0xf]
        %v602 = vld [vmem:[%s460 + $0x60] sm:$0xff]
        %v603 = vld [vmem:[%s460 + $0x68] sm:$0xf]
        %v604 = vld [vmem:[%s460 + $0x6c] sm:$0xff]
        %v605 = vld [vmem:[%s460 + $0x74] sm:$0xf]
        %v606 = vld [vmem:[%s460 + $0x78] sm:$0xff]
        %v607 = vld [vmem:[%s460 + $0x80] sm:$0xf]
        %v608 = vld [vmem:[%s460 + $0x84] sm:$0xff]
        %v609 = vld [vmem:[%s460 + $0x8c] sm:$0xf]
        %v610 = vld [vmem:[%s460 + $0x90] sm:$0xff]
        %v611 = vld [vmem:[%s460 + $0x98] sm:$0xf]
        %v612 = vld [vmem:[%s460 + $0x9c] sm:$0xff]
        %v613 = vld [vmem:[%s460 + $0xa4] sm:$0xf]
        %v614 = vld [vmem:[%s460 + $0xa8] sm:$0xff]
        %v615 = vld [vmem:[%s460 + $0xb0] sm:$0xf]
        %v616 = vld [vmem:[%s460 + $0xb4] sm:$0xff]
        %v617 = vld [vmem:[%s460 + $0xbc] sm:$0xf]
        %v618 = vld [vmem:[%s469] sm:$0x7]
        %v620 = vlaneseq
        %v621 = vshrl.u32 %v620, 7
        %v622 = vsub.s32 0, %v621
        %v623 = vrot.slane %v618, %v622
        %v624 = vlaneseq
        %v625 = vshrl.u32 %v624, 7
        %v626 = vsub.s32 1, %v625
        %v627 = vrot.slane %v618, %v626
        %v628 = vlaneseq
        %v629 = vshrl.u32 %v628, 7
        %v630 = vsub.s32 2, %v629
        %v631 = vrot.slane %v618, %v630
        %v667 = vunpack.c.l.b16 %v586
        %v668 = vunpack.c.h.b16 %v586
        %v669 = vunpack.c.l.b16 %v587
        %v670 = vunpack.c.l.b16 %v588
        %v671 = vunpack.c.h.b16 %v588
        %v672 = vunpack.c.l.b16 %v589
        %v673 = vunpack.c.l.b16 %v590
        %v674 = vunpack.c.h.b16 %v590
        %v675 = vunpack.c.l.b16 %v591
        %v676 = vunpack.c.l.b16 %v592
        %v677 = vunpack.c.h.b16 %v592
        %v678 = vunpack.c.l.b16 %v593
        %v679 = vunpack.c.l.b16 %v594
        %v680 = vunpack.c.h.b16 %v594
        %v681 = vunpack.c.l.b16 %v595
        %v682 = vunpack.c.l.b16 %v596
        %v683 = vunpack.c.h.b16 %v596
        %v684 = vunpack.c.l.b16 %v597
        %v685 = vunpack.c.l.b16 %v598
        %v686 = vunpack.c.h.b16 %v598
        %v687 = vunpack.c.l.b16 %v599
        %v688 = vunpack.c.l.b16 %v600
        %v689 = vunpack.c.h.b16 %v600
        %v690 = vunpack.c.l.b16 %v601
        %v691 = vunpack.c.l.b16 %v602
        %v692 = vunpack.c.h.b16 %v602
        %v693 = vunpack.c.l.b16 %v603
        %v694 = vunpack.c.l.b16 %v604
        %v695 = vunpack.c.h.b16 %v604
        %v696 = vunpack.c.l.b16 %v605
        %v697 = vunpack.c.l.b16 %v606
        %v698 = vunpack.c.h.b16 %v606
        %v699 = vunpack.c.l.b16 %v607
        %v700 = vunpack.c.l.b16 %v608
        %v701 = vunpack.c.h.b16 %v608
        %v702 = vunpack.c.l.b16 %v609
        %v703 = vunpack.c.l.b16 %v610
        %v704 = vunpack.c.h.b16 %v610
        %v705 = vunpack.c.l.b16 %v611
        %v706 = vunpack.c.l.b16 %v612
        %v707 = vunpack.c.h.b16 %v612
        %v708 = vunpack.c.l.b16 %v613
        %v709 = vunpack.c.l.b16 %v614
        %v710 = vunpack.c.h.b16 %v614
        %v711 = vunpack.c.l.b16 %v615
        %v712 = vunpack.c.l.b16 %v616
        %v713 = vunpack.c.h.b16 %v616
        %v714 = vunpack.c.l.b16 %v617
        %v715 = vpack.c.b16 %v670, %v667
        %v716 = vpack.c.b16 %v671, %v668
        %v717 = vpack.c.b16 %v672, %v669
        %v718 = vpack.c.b16 %v676, %v673
        %v719 = vpack.c.b16 %v677, %v674
        %v720 = vpack.c.b16 %v678, %v675
        %v721 = vpack.c.b16 %v682, %v679
        %v722 = vpack.c.b16 %v683, %v680
        %v723 = vpack.c.b16 %v684, %v681
        %v724 = vpack.c.b16 %v688, %v685
        %v725 = vpack.c.b16 %v689, %v686
        %v726 = vpack.c.b16 %v690, %v687
        %v727 = vpack.c.b16 %v694, %v691
        %v728 = vpack.c.b16 %v695, %v692
        %v729 = vpack.c.b16 %v696, %v693
        %v730 = vpack.c.b16 %v700, %v697
        %v731 = vpack.c.b16 %v701, %v698
        %v732 = vpack.c.b16 %v702, %v699
        %v733 = vpack.c.b16 %v706, %v703
        %v734 = vpack.c.b16 %v707, %v704
        %v735 = vpack.c.b16 %v708, %v705
        %v736 = vpack.c.b16 %v712, %v709
        %v737 = vpack.c.b16 %v713, %v710
        %v738 = vpack.c.b16 %v714, %v711
        %763 = vmatprep.subr.bf16.mxu0 %v737
        %764 = vmatpush1.bf16.msra.mxu0 %v736
        %765 = vmatprep.subr.bf16.mxu0 %v734
        %766 = vmatpush1.bf16.msra.mxu0 %v733
        %767 = vmatprep.subr.bf16.mxu0 %v731
        %768 = vmatpush1.bf16.msra.mxu0 %v730
        %769 = vmatprep.subr.bf16.mxu0 %v728
        %770 = vmatpush1.bf16.msra.mxu0 %v727
        %771 = vmatprep.subr.bf16.mxu0 %v725
        %772 = vmatpush1.bf16.msra.mxu0 %v724
        %773 = vmatprep.subr.bf16.mxu0 %v722
        %774 = vmatpush1.bf16.msra.mxu0 %v721
        %775 = vmatprep.subr.bf16.mxu0 %v719
        %776 = vmatpush1.bf16.msra.mxu0 %v718
        %777 = vmatprep.subr.bf16.mxu0 %v716
        %778 = vmatpush1.bf16.msra.mxu0 %v715
        %779 = vmatprep.subr.bf16.mxu0 0
        %780 = vmatpush2.bf16.msra.mxu0 0
        %781 = vmatprep.subr.bf16.mxu0 0
        %782 = vmatpush2.bf16.msra.mxu0 0
        %783 = vmatprep.subr.bf16.mxu0 0
        %784 = vmatpush2.bf16.msra.mxu0 0
        %785 = vmatprep.subr.bf16.mxu0 0
        %786 = vmatpush2.bf16.msra.mxu0 0
        %787 = vmatprep.subr.bf16.mxu0 0
        %788 = vmatpush2.bf16.msra.mxu0 0
        %789 = vmatprep.subr.bf16.mxu0 0
        %790 = vmatpush2.bf16.msra.mxu0 0
        %791 = vmatprep.subr.bf16.mxu0 0
        %792 = vmatpush2.bf16.msra.mxu0 0
        %793 = vmatprep.subr.bf16.mxu0 0
        %794 = vmatpush2.bf16.msra.mxu0 0
        %795 = vmatprep.mubr.bf16.mxu0 0
        %796 = vmatmul.mubr.bf16.gmra.mxu0 %v584
        %v797 = vpop.f32.mrf.mxu0
        %v798 = vadd.f32 %v623, %v797
        %v799 = vpop.f32.mrf.mxu0
        %v800 = vadd.f32 %v627, %v799
        %v801 = vpop.f32.mrf.mxu0
        %v802 = vpop.f32.mrf.mxu0
        %803 = vdwg.mxu0
        %804 = vmatprep.subr.bf16.mxu0 0
        %805 = vmatpush1.bf16.msra.mxu0 %v738
        %806 = vmatprep.subr.bf16.mxu0 0
        %807 = vmatpush1.bf16.msra.mxu0 %v735
        %808 = vmatprep.subr.bf16.mxu0 0
        %809 = vmatpush1.bf16.msra.mxu0 %v732
        %810 = vmatprep.subr.bf16.mxu0 0
        %811 = vmatpush1.bf16.msra.mxu0 %v729
        %812 = vmatprep.subr.bf16.mxu0 0
        %813 = vmatpush1.bf16.msra.mxu0 %v726
        %814 = vmatprep.subr.bf16.mxu0 0
        %815 = vmatpush1.bf16.msra.mxu0 %v723
        %816 = vmatprep.subr.bf16.mxu0 0
        %817 = vmatpush1.bf16.msra.mxu0 %v720
        %818 = vmatprep.subr.bf16.mxu0 0
        %819 = vmatpush1.bf16.msra.mxu0 %v717
        %820 = vmatprep.subr.bf16.mxu0 0
        %821 = vmatpush2.bf16.msra.mxu0 0
        %822 = vmatprep.subr.bf16.mxu0 0
        %823 = vmatpush2.bf16.msra.mxu0 0
        %824 = vmatprep.subr.bf16.mxu0 0
        %825 = vmatpush2.bf16.msra.mxu0 0
        %826 = vmatprep.subr.bf16.mxu0 0
        %827 = vmatpush2.bf16.msra.mxu0 0
        %828 = vmatprep.subr.bf16.mxu0 0
        %829 = vmatpush2.bf16.msra.mxu0 0
        %830 = vmatprep.subr.bf16.mxu0 0
        %831 = vmatpush2.bf16.msra.mxu0 0
        %832 = vmatprep.subr.bf16.mxu0 0
        %833 = vmatpush2.bf16.msra.mxu0 0
        %834 = vmatprep.subr.bf16.mxu0 0
        %835 = vmatpush2.bf16.msra.mxu0 0
        %836 = vmatprep.mubr.bf16.mxu0 0
        %837 = vmatmul.mubr.bf16.gmra.mxu0 %v584
        %v838 = vpop.f32.mrf.mxu0
        %v839 = vadd.f32 %v631, %v838
        %v840 = vpop.f32.mrf.mxu0
        %v841 = vpop.f32.mrf.mxu0
        %v842 = vpop.f32.mrf.mxu0
        %843 = vdwg.mxu0
        %v844 = vmul.f32 %v798, 0.17677669
        %846 = vrot.lane.b32.xlu0 %v844, 96
        %v847 = vpop.permute.xlu0 %846
        %849 = vrot.lane.b32.xlu0 %v844, 64
        %v850 = vpop.permute.xlu0 %849
        %852 = vrot.lane.b32.xlu0 %v844, 32
        %v853 = vpop.permute.xlu0 %852
        %v855 = vcombine.low %v844, %v850
        %v856 = vcombine.high %v844, %v850
        %v858 = vunpack.c.l.s4 1983009808
        %v859 = vunpack.c.0.s8 %v858
        %v860 = vlaneseq
        %v861 = vshrl.u32 %v860, 7
        %v862 = vsub.s32 %v859, %v861
        %v863 = vrot.slane %v855, %v862
        %v865 = vunpack.c.l.s4 1983009808
        %v866 = vunpack.c.0.s8 %v865
        %v867 = vlaneseq
        %v868 = vshrl.u32 %v867, 7
        %v869 = vsub.s32 %v866, %v868
        %v870 = vrot.slane %v856, %v869
        %v871 = vcombine.low %v847, %v853
        %v872 = vcombine.high %v847, %v853
        %v874 = vunpack.c.l.s4 1983009808
        %v875 = vunpack.c.0.s8 %v874
        %v876 = vlaneseq
        %v877 = vshrl.u32 %v876, 7
        %v878 = vsub.s32 %v875, %v877
        %v879 = vrot.slane %v871, %v878
        %v881 = vunpack.c.l.s4 1983009808
        %v882 = vunpack.c.0.s8 %v881
        %v883 = vlaneseq
        %v884 = vshrl.u32 %v883, 7
        %v885 = vsub.s32 %v882, %v884
        %v886 = vrot.slane %v872, %v885
        %v887 = vcombine.low %v863, %v879
        %v888 = vcombine.high %v863, %v879
        %v890 = vunpack.c.l.s4 1934713408
        %v891 = vunpack.c.0.s8 %v890
        %v892 = vlaneseq
        %v893 = vshrl.u32 %v892, 7
        %v894 = vsub.s32 %v891, %v893
        %v895 = vrot.slane %v887, %v894
        %v897 = vunpack.c.l.s4 1934713408
        %v898 = vunpack.c.0.s8 %v897
        %v899 = vlaneseq
        %v900 = vshrl.u32 %v899, 7
        %v901 = vsub.s32 %v898, %v900
        %v902 = vrot.slane %v888, %v901
        %v903 = vcombine.low %v870, %v886
        %v904 = vcombine.high %v870, %v886
        %v906 = vunpack.c.l.s4 1934713408
        %v907 = vunpack.c.0.s8 %v906
        %v908 = vlaneseq
        %v909 = vshrl.u32 %v908, 7
        %v910 = vsub.s32 %v907, %v909
        %v911 = vrot.slane %v903, %v910
        %v913 = vunpack.c.l.s4 1934713408
        %v914 = vunpack.c.0.s8 %v913
        %v915 = vlaneseq
        %v916 = vshrl.u32 %v915, 7
        %v917 = vsub.s32 %v914, %v916
        %v918 = vrot.slane %v904, %v917
        %v919 = vcombine.high %v895, 0.0
        %v920 = vcombine.high %v902, 0.0
        %v921 = vcombine.high %v911, 0.0
        %v922 = vcombine.high %v918, 0.0
        %v923 = vcombine.low %v895, %v902
        %v925 = vunpack.c.l.s4 1983009808
        %v926 = vunpack.c.0.s8 %v925
        %v927 = vlaneseq
        %v928 = vshrl.u32 %v927, 7
        %v929 = vsub.s32 %v926, %v928
        %v930 = vrot.slane %v923, %v929
        %v931 = vcombine.low %v919, %v920
        %v933 = vunpack.c.l.s4 1983009808
        %v934 = vunpack.c.0.s8 %v933
        %v935 = vlaneseq
        %v936 = vshrl.u32 %v935, 7
        %v937 = vsub.s32 %v934, %v936
        %v938 = vrot.slane %v931, %v937
        %v939 = vcombine.low %v911, %v918
        %v941 = vunpack.c.l.s4 1983009808
        %v942 = vunpack.c.0.s8 %v941
        %v943 = vlaneseq
        %v944 = vshrl.u32 %v943, 7
        %v945 = vsub.s32 %v942, %v944
        %v946 = vrot.slane %v939, %v945
        %v947 = vcombine.low %v921, %v922
        %v949 = vunpack.c.l.s4 1983009808
        %v950 = vunpack.c.0.s8 %v949
        %v951 = vlaneseq
        %v952 = vshrl.u32 %v951, 7
        %v953 = vsub.s32 %v950, %v952
        %v954 = vrot.slane %v947, %v953
        %v955 = vcombine.low %v930, %v938
        %v956 = vcombine.high %v930, %v938
        %v958 = vunpack.c.l.s4 1934713408
        %v959 = vunpack.c.0.s8 %v958
        %v960 = vlaneseq
        %v961 = vshrl.u32 %v960, 7
        %v962 = vsub.s32 %v959, %v961
        %v963 = vrot.slane %v955, %v962
        %v965 = vunpack.c.l.s4 1934713408
        %v966 = vunpack.c.0.s8 %v965
        %v967 = vlaneseq
        %v968 = vshrl.u32 %v967, 7
        %v969 = vsub.s32 %v966, %v968
        %v970 = vrot.slane %v956, %v969
        %v971 = vcombine.low %v946, %v954
        %v972 = vcombine.high %v946, %v954
        %v974 = vunpack.c.l.s4 1934713408
        %v975 = vunpack.c.0.s8 %v974
        %v976 = vlaneseq
        %v977 = vshrl.u32 %v976, 7
        %v978 = vsub.s32 %v975, %v977
        %v979 = vrot.slane %v971, %v978
        %v981 = vunpack.c.l.s4 1934713408
        %v982 = vunpack.c.0.s8 %v981
        %v983 = vlaneseq
        %v984 = vshrl.u32 %v983, 7
        %v985 = vsub.s32 %v982, %v984
        %v986 = vrot.slane %v972, %v985
        %v987 = vcombine.low %v963, %v979
        %v988 = vcombine.high %v963, %v979
        %v989 = vcombine.low %v970, %v986
        %v990 = vcombine.high %v970, %v986
        %v991 = vpack.c.bf16 %v987, %v987
        %v992 = vpack.c.bf16 %v988, %v988
        %v993 = vpack.c.bf16 %v989, %v989
        %v994 = vpack.c.bf16 %v990, %v990
        %996 = vrot.lane.b32.xlu0 %v800, 96
        %v997 = vpop.permute.xlu0 %996
        %999 = vrot.lane.b32.xlu0 %v800, 64
        %v1000 = vpop.permute.xlu0 %999
        %1002 = vrot.lane.b32.xlu0 %v800, 32
        %v1003 = vpop.permute.xlu0 %1002
        %v1005 = vcombine.low %v800, %v1000
        %v1006 = vcombine.high %v800, %v1000
        %v1008 = vunpack.c.l.s4 1983009808
        %v1009 = vunpack.c.0.s8 %v1008
        %v1010 = vlaneseq
        %v1011 = vshrl.u32 %v1010, 7
        %v1012 = vsub.s32 %v1009, %v1011
        %v1013 = vrot.slane %v1005, %v1012
        %v1015 = vunpack.c.l.s4 1983009808
        %v1016 = vunpack.c.0.s8 %v1015
        %v1017 = vlaneseq
        %v1018 = vshrl.u32 %v1017, 7
        %v1019 = vsub.s32 %v1016, %v1018
        %v1020 = vrot.slane %v1006, %v1019
        %v1021 = vcombine.low %v997, %v1003
        %v1022 = vcombine.high %v997, %v1003
        %v1024 = vunpack.c.l.s4 1983009808
        %v1025 = vunpack.c.0.s8 %v1024
        %v1026 = vlaneseq
        %v1027 = vshrl.u32 %v1026, 7
        %v1028 = vsub.s32 %v1025, %v1027
        %v1029 = vrot.slane %v1021, %v1028
        %v1031 = vunpack.c.l.s4 1983009808
        %v1032 = vunpack.c.0.s8 %v1031
        %v1033 = vlaneseq
        %v1034 = vshrl.u32 %v1033, 7
        %v1035 = vsub.s32 %v1032, %v1034
        %v1036 = vrot.slane %v1022, %v1035
        %v1037 = vcombine.low %v1013, %v1029
        %v1038 = vcombine.high %v1013, %v1029
        %v1040 = vunpack.c.l.s4 1934713408
        %v1041 = vunpack.c.0.s8 %v1040
        %v1042 = vlaneseq
        %v1043 = vshrl.u32 %v1042, 7
        %v1044 = vsub.s32 %v1041, %v1043
        %v1045 = vrot.slane %v1037, %v1044
        %v1047 = vunpack.c.l.s4 1934713408
        %v1048 = vunpack.c.0.s8 %v1047
        %v1049 = vlaneseq
        %v1050 = vshrl.u32 %v1049, 7
        %v1051 = vsub.s32 %v1048, %v1050
        %v1052 = vrot.slane %v1038, %v1051
        %v1053 = vcombine.low %v1020, %v1036
        %v1054 = vcombine.high %v1020, %v1036
        %v1056 = vunpack.c.l.s4 1934713408
        %v1057 = vunpack.c.0.s8 %v1056
        %v1058 = vlaneseq
        %v1059 = vshrl.u32 %v1058, 7
        %v1060 = vsub.s32 %v1057, %v1059
        %v1061 = vrot.slane %v1053, %v1060
        %v1063 = vunpack.c.l.s4 1934713408
        %v1064 = vunpack.c.0.s8 %v1063
        %v1065 = vlaneseq
        %v1066 = vshrl.u32 %v1065, 7
        %v1067 = vsub.s32 %v1064, %v1066
        %v1068 = vrot.slane %v1054, %v1067
        %v1069 = vcombine.high %v1045, 0.0
        %v1070 = vcombine.high %v1052, 0.0
        %v1071 = vcombine.high %v1061, 0.0
        %v1072 = vcombine.high %v1068, 0.0
        %v1073 = vcombine.low %v1045, %v1052
        %v1075 = vunpack.c.l.s4 1983009808
        %v1076 = vunpack.c.0.s8 %v1075
        %v1077 = vlaneseq
        %v1078 = vshrl.u32 %v1077, 7
        %v1079 = vsub.s32 %v1076, %v1078
        %v1080 = vrot.slane %v1073, %v1079
        %v1081 = vcombine.low %v1069, %v1070
        %v1083 = vunpack.c.l.s4 1983009808
        %v1084 = vunpack.c.0.s8 %v1083
        %v1085 = vlaneseq
        %v1086 = vshrl.u32 %v1085, 7
        %v1087 = vsub.s32 %v1084, %v1086
        %v1088 = vrot.slane %v1081, %v1087
        %v1089 = vcombine.low %v1061, %v1068
        %v1091 = vunpack.c.l.s4 1983009808
        %v1092 = vunpack.c.0.s8 %v1091
        %v1093 = vlaneseq
        %v1094 = vshrl.u32 %v1093, 7
        %v1095 = vsub.s32 %v1092, %v1094
        %v1096 = vrot.slane %v1089, %v1095
        %v1097 = vcombine.low %v1071, %v1072
        %v1099 = vunpack.c.l.s4 1983009808
        %v1100 = vunpack.c.0.s8 %v1099
        %v1101 = vlaneseq
        %v1102 = vshrl.u32 %v1101, 7
        %v1103 = vsub.s32 %v1100, %v1102
        %v1104 = vrot.slane %v1097, %v1103
        %v1105 = vcombine.low %v1080, %v1088
        %v1106 = vcombine.high %v1080, %v1088
        %v1108 = vunpack.c.l.s4 1934713408
        %v1109 = vunpack.c.0.s8 %v1108
        %v1110 = vlaneseq
        %v1111 = vshrl.u32 %v1110, 7
        %v1112 = vsub.s32 %v1109, %v1111
        %v1113 = vrot.slane %v1105, %v1112
        %v1115 = vunpack.c.l.s4 1934713408
        %v1116 = vunpack.c.0.s8 %v1115
        %v1117 = vlaneseq
        %v1118 = vshrl.u32 %v1117, 7
        %v1119 = vsub.s32 %v1116, %v1118
        %v1120 = vrot.slane %v1106, %v1119
        %v1121 = vcombine.low %v1096, %v1104
        %v1122 = vcombine.high %v1096, %v1104
        %v1124 = vunpack.c.l.s4 1934713408
        %v1125 = vunpack.c.0.s8 %v1124
        %v1126 = vlaneseq
        %v1127 = vshrl.u32 %v1126, 7
        %v1128 = vsub.s32 %v1125, %v1127
        %v1129 = vrot.slane %v1121, %v1128
        %v1131 = vunpack.c.l.s4 1934713408
        %v1132 = vunpack.c.0.s8 %v1131
        %v1133 = vlaneseq
        %v1134 = vshrl.u32 %v1133, 7
        %v1135 = vsub.s32 %v1132, %v1134
        %v1136 = vrot.slane %v1122, %v1135
        %v1137 = vcombine.low %v1113, %v1129
        %v1138 = vcombine.high %v1113, %v1129
        %v1139 = vcombine.low %v1120, %v1136
        %v1140 = vcombine.high %v1120, %v1136
        %v1141 = vpack.c.bf16 %v1137, %v1137
        %v1142 = vpack.c.bf16 %v1138, %v1138
        %v1143 = vpack.c.bf16 %v1139, %v1139
        %v1144 = vpack.c.bf16 %v1140, %v1140
        %1146 = vrot.lane.b32.xlu0 %v839, 96
        %v1147 = vpop.permute.xlu0 %1146
        %1149 = vrot.lane.b32.xlu0 %v839, 64
        %v1150 = vpop.permute.xlu0 %1149
        %1152 = vrot.lane.b32.xlu0 %v839, 32
        %v1153 = vpop.permute.xlu0 %1152
        %v1155 = vcombine.low %v839, %v1150
        %v1156 = vcombine.high %v839, %v1150
        %v1158 = vunpack.c.l.s4 1983009808
        %v1159 = vunpack.c.0.s8 %v1158
        %v1160 = vlaneseq
        %v1161 = vshrl.u32 %v1160, 7
        %v1162 = vsub.s32 %v1159, %v1161
        %v1163 = vrot.slane %v1155, %v1162
        %v1165 = vunpack.c.l.s4 1983009808
        %v1166 = vunpack.c.0.s8 %v1165
        %v1167 = vlaneseq
        %v1168 = vshrl.u32 %v1167, 7
        %v1169 = vsub.s32 %v1166, %v1168
        %v1170 = vrot.slane %v1156, %v1169
        %v1171 = vcombine.low %v1147, %v1153
        %v1172 = vcombine.high %v1147, %v1153
        %v1174 = vunpack.c.l.s4 1983009808
        %v1175 = vunpack.c.0.s8 %v1174
        %v1176 = vlaneseq
        %v1177 = vshrl.u32 %v1176, 7
        %v1178 = vsub.s32 %v1175, %v1177
        %v1179 = vrot.slane %v1171, %v1178
        %v1181 = vunpack.c.l.s4 1983009808
        %v1182 = vunpack.c.0.s8 %v1181
        %v1183 = vlaneseq
        %v1184 = vshrl.u32 %v1183, 7
        %v1185 = vsub.s32 %v1182, %v1184
        %v1186 = vrot.slane %v1172, %v1185
        %v1187 = vcombine.low %v1163, %v1179
        %v1188 = vcombine.high %v1163, %v1179
        %v1190 = vunpack.c.l.s4 1934713408
        %v1191 = vunpack.c.0.s8 %v1190
        %v1192 = vlaneseq
        %v1193 = vshrl.u32 %v1192, 7
        %v1194 = vsub.s32 %v1191, %v1193
        %v1195 = vrot.slane %v1187, %v1194
        %v1197 = vunpack.c.l.s4 1934713408
        %v1198 = vunpack.c.0.s8 %v1197
        %v1199 = vlaneseq
        %v1200 = vshrl.u32 %v1199, 7
        %v1201 = vsub.s32 %v1198, %v1200
        %v1202 = vrot.slane %v1188, %v1201
        %v1203 = vcombine.low %v1170, %v1186
        %v1204 = vcombine.high %v1170, %v1186
        %v1206 = vunpack.c.l.s4 1934713408
        %v1207 = vunpack.c.0.s8 %v1206
        %v1208 = vlaneseq
        %v1209 = vshrl.u32 %v1208, 7
        %v1210 = vsub.s32 %v1207, %v1209
        %v1211 = vrot.slane %v1203, %v1210
        %v1213 = vunpack.c.l.s4 1934713408
        %v1214 = vunpack.c.0.s8 %v1213
        %v1215 = vlaneseq
        %v1216 = vshrl.u32 %v1215, 7
        %v1217 = vsub.s32 %v1214, %v1216
        %v1218 = vrot.slane %v1204, %v1217
        %v1219 = vcombine.high %v1195, 0.0
        %v1220 = vcombine.high %v1202, 0.0
        %v1221 = vcombine.high %v1211, 0.0
        %v1222 = vcombine.high %v1218, 0.0
        %v1223 = vcombine.low %v1195, %v1202
        %v1225 = vunpack.c.l.s4 1983009808
        %v1226 = vunpack.c.0.s8 %v1225
        %v1227 = vlaneseq
        %v1228 = vshrl.u32 %v1227, 7
        %v1229 = vsub.s32 %v1226, %v1228
        %v1230 = vrot.slane %v1223, %v1229
        %v1231 = vcombine.low %v1219, %v1220
        %v1233 = vunpack.c.l.s4 1983009808
        %v1234 = vunpack.c.0.s8 %v1233
        %v1235 = vlaneseq
        %v1236 = vshrl.u32 %v1235, 7
        %v1237 = vsub.s32 %v1234, %v1236
        %v1238 = vrot.slane %v1231, %v1237
        %v1239 = vcombine.low %v1211, %v1218
        %v1241 = vunpack.c.l.s4 1983009808
        %v1242 = vunpack.c.0.s8 %v1241
        %v1243 = vlaneseq
        %v1244 = vshrl.u32 %v1243, 7
        %v1245 = vsub.s32 %v1242, %v1244
        %v1246 = vrot.slane %v1239, %v1245
        %v1247 = vcombine.low %v1221, %v1222
        %v1249 = vunpack.c.l.s4 1983009808
        %v1250 = vunpack.c.0.s8 %v1249
        %v1251 = vlaneseq
        %v1252 = vshrl.u32 %v1251, 7
        %v1253 = vsub.s32 %v1250, %v1252
        %v1254 = vrot.slane %v1247, %v1253
        %v1255 = vcombine.low %v1230, %v1238
        %v1256 = vcombine.high %v1230, %v1238
        %v1258 = vunpack.c.l.s4 1934713408
        %v1259 = vunpack.c.0.s8 %v1258
        %v1260 = vlaneseq
        %v1261 = vshrl.u32 %v1260, 7
        %v1262 = vsub.s32 %v1259, %v1261
        %v1263 = vrot.slane %v1255, %v1262
        %v1265 = vunpack.c.l.s4 1934713408
        %v1266 = vunpack.c.0.s8 %v1265
        %v1267 = vlaneseq
        %v1268 = vshrl.u32 %v1267, 7
        %v1269 = vsub.s32 %v1266, %v1268
        %v1270 = vrot.slane %v1256, %v1269
        %v1271 = vcombine.low %v1246, %v1254
        %v1272 = vcombine.high %v1246, %v1254
        %v1274 = vunpack.c.l.s4 1934713408
        %v1275 = vunpack.c.0.s8 %v1274
        %v1276 = vlaneseq
        %v1277 = vshrl.u32 %v1276, 7
        %v1278 = vsub.s32 %v1275, %v1277
        %v1279 = vrot.slane %v1271, %v1278
        %v1281 = vunpack.c.l.s4 1934713408
        %v1282 = vunpack.c.0.s8 %v1281
        %v1283 = vlaneseq
        %v1284 = vshrl.u32 %v1283, 7
        %v1285 = vsub.s32 %v1282, %v1284
        %v1286 = vrot.slane %v1272, %v1285
        %v1287 = vcombine.low %v1263, %v1279
        %v1288 = vcombine.high %v1263, %v1279
        %v1289 = vcombine.low %v1270, %v1286
        %v1290 = vcombine.high %v1270, %v1286
        %v1291 = vpack.c.bf16 %v1287, %v1287
        %v1292 = vpack.c.bf16 %v1288, %v1288
        %v1293 = vpack.c.bf16 %v1289, %v1289
        %v1294 = vpack.c.bf16 %v1290, %v1290
        %vm1295 = vcmask 261120
        %v1297 = vsel %vm1295, %v991, 0
        %v1300 = vsel %vm1295, %v1141, 0
        %1302 = vmatprep.subr.bf16.mxu0 0
        %1303 = vmatpush1.bf16.xpose.msra.mxu0 0
        %1304 = vmatprep.subr.bf16.mxu0 0
        %1305 = vmatpush1.bf16.xpose.msra.mxu0 0
        %1306 = vmatprep.subr.bf16.mxu0 0
        %1307 = vmatpush1.bf16.xpose.msra.mxu0 0
        %1308 = vmatprep.subr.bf16.mxu0 0
        %1309 = vmatpush1.bf16.xpose.msra.mxu0 0
        %1310 = vmatprep.subr.bf16.mxu0 0
        %1311 = vmatpush1.bf16.xpose.msra.mxu0 0
        %1312 = vmatprep.subr.bf16.mxu0 0
        %1313 = vmatpush1.bf16.xpose.msra.mxu0 0
        %1314 = vmatprep.subr.bf16.mxu0 0
        %1315 = vmatpush1.bf16.xpose.msra.mxu0 0
        %1316 = vmatprep.subr.bf16.mxu0 0
        %1317 = vmatpush1.bf16.xpose.msra.mxu0 %v1300
        %1318 = vmatprep.subr.bf16.mxu0 0
        %1319 = vmatpush2.bf16.xpose.msra.mxu0 0
        %1320 = vmatprep.subr.bf16.mxu0 0
        %1321 = vmatpush2.bf16.xpose.msra.mxu0 0
        %1322 = vmatprep.subr.bf16.mxu0 0
        %1323 = vmatpush2.bf16.xpose.msra.mxu0 0
        %1324 = vmatprep.subr.bf16.mxu0 0
        %1325 = vmatpush2.bf16.xpose.msra.mxu0 0
        %1326 = vmatprep.subr.bf16.mxu0 0
        %1327 = vmatpush2.bf16.xpose.msra.mxu0 0
        %1328 = vmatprep.subr.bf16.mxu0 0
        %1329 = vmatpush2.bf16.xpose.msra.mxu0 0
        %1330 = vmatprep.subr.bf16.mxu0 0
        %1331 = vmatpush2.bf16.xpose.msra.mxu0 0
        %1332 = vmatprep.subr.bf16.mxu0 0
        %1333 = vmatpush2.bf16.xpose.msra.mxu0 0
        %1334 = vmatprep.mubr.bf16.mxu0 0
        %1335 = vmatmul.mubr.bf16.gmra.mxu0 %v1297
        %v1336 = vpop.f32.mrf.mxu0
        %v1337 = vadd.f32 0.0, %v1336
        %v1338 = vpop.f32.mrf.mxu0
        %v1339 = vpop.f32.mrf.mxu0
        %v1340 = vpop.f32.mrf.mxu0
        %1341 = vdwg.mxu0
        %v1343 = vsel %vm1295, %v992, 0
        %v1346 = vsel %vm1295, %v1142, 0
        %1348 = vmatprep.subr.bf16.mxu0 0
        %1349 = vmatpush1.bf16.xpose.msra.mxu0 0
        %1350 = vmatprep.subr.bf16.mxu0 0
        %1351 = vmatpush1.bf16.xpose.msra.mxu0 0
        %1352 = vmatprep.subr.bf16.mxu0 0
        %1353 = vmatpush1.bf16.xpose.msra.mxu0 0
        %1354 = vmatprep.subr.bf16.mxu0 0
        %1355 = vmatpush1.bf16.xpose.msra.mxu0 0
        %1356 = vmatprep.subr.bf16.mxu0 0
        %1357 = vmatpush1.bf16.xpose.msra.mxu0 0
        %1358 = vmatprep.subr.bf16.mxu0 0
        %1359 = vmatpush1.bf16.xpose.msra.mxu0 0
        %1360 = vmatprep.subr.bf16.mxu0 0
        %1361 = vmatpush1.bf16.xpose.msra.mxu0 0
        %1362 = vmatprep.subr.bf16.mxu0 0
        %1363 = vmatpush1.bf16.xpose.msra.mxu0 %v1346
        %1364 = vmatprep.subr.bf16.mxu0 0
        %1365 = vmatpush2.bf16.xpose.msra.mxu0 0
        %1366 = vmatprep.subr.bf16.mxu0 0
        %1367 = vmatpush2.bf16.xpose.msra.mxu0 0
        %1368 = vmatprep.subr.bf16.mxu0 0
        %1369 = vmatpush2.bf16.xpose.msra.mxu0 0
        %1370 = vmatprep.subr.bf16.mxu0 0
        %1371 = vmatpush2.bf16.xpose.msra.mxu0 0
        %1372 = vmatprep.subr.bf16.mxu0 0
        %1373 = vmatpush2.bf16.xpose.msra.mxu0 0
        %1374 = vmatprep.subr.bf16.mxu0 0
        %1375 = vmatpush2.bf16.xpose.msra.mxu0 0
        %1376 = vmatprep.subr.bf16.mxu0 0
        %1377 = vmatpush2.bf16.xpose.msra.mxu0 0
        %1378 = vmatprep.subr.bf16.mxu0 0
        %1379 = vmatpush2.bf16.xpose.msra.mxu0 0
        %1380 = vmatprep.mubr.bf16.mxu0 0
        %1381 = vmatmul.mubr.bf16.gmra.mxu0 %v1343
        %v1382 = vpop.f32.mrf.mxu0
        %v1383 = vadd.f32 0.0, %v1382
        %v1384 = vpop.f32.mrf.mxu0
        %v1385 = vpop.f32.mrf.mxu0
        %v1386 = vpop.f32.mrf.mxu0
        %1387 = vdwg.mxu0
        %v1389 = vsel %vm1295, %v993, 0
        %v1392 = vsel %vm1295, %v1143, 0
        %1394 = vmatprep.subr.bf16.mxu0 0
        %1395 = vmatpush1.bf16.xpose.msra.mxu0 0
        %1396 = vmatprep.subr.bf16.mxu0 0
        %1397 = vmatpush1.bf16.xpose.msra.mxu0 0
        %1398 = vmatprep.subr.bf16.mxu0 0
        %1399 = vmatpush1.bf16.xpose.msra.mxu0 0
        %1400 = vmatprep.subr.bf16.mxu0 0
        %1401 = vmatpush1.bf16.xpose.msra.mxu0 0
        %1402 = vmatprep.subr.bf16.mxu0 0
        %1403 = vmatpush1.bf16.xpose.msra.mxu0 0
        %1404 = vmatprep.subr.bf16.mxu0 0
        %1405 = vmatpush1.bf16.xpose.msra.mxu0 0
        %1406 = vmatprep.subr.bf16.mxu0 0
        %1407 = vmatpush1.bf16.xpose.msra.mxu0 0
        %1408 = vmatprep.subr.bf16.mxu0 0
        %1409 = vmatpush1.bf16.xpose.msra.mxu0 %v1392
        %1410 = vmatprep.subr.bf16.mxu0 0
        %1411 = vmatpush2.bf16.xpose.msra.mxu0 0
        %1412 = vmatprep.subr.bf16.mxu0 0
        %1413 = vmatpush2.bf16.xpose.msra.mxu0 0
        %1414 = vmatprep.subr.bf16.mxu0 0
        %1415 = vmatpush2.bf16.xpose.msra.mxu0 0
        %1416 = vmatprep.subr.bf16.mxu0 0
        %1417 = vmatpush2.bf16.xpose.msra.mxu0 0
        %1418 = vmatprep.subr.bf16.mxu0 0
        %1419 = vmatpush2.bf16.xpose.msra.mxu0 0
        %1420 = vmatprep.subr.bf16.mxu0 0
        %1421 = vmatpush2.bf16.xpose.msra.mxu0 0
        %1422 = vmatprep.subr.bf16.mxu0 0
        %1423 = vmatpush2.bf16.xpose.msra.mxu0 0
        %1424 = vmatprep.subr.bf16.mxu0 0
        %1425 = vmatpush2.bf16.xpose.msra.mxu0 0
        %1426 = vmatprep.mubr.bf16.mxu0 0
        %1427 = vmatmul.mubr.bf16.gmra.mxu0 %v1389
        %v1428 = vpop.f32.mrf.mxu0
        %v1429 = vadd.f32 0.0, %v1428
        %v1430 = vpop.f32.mrf.mxu0
        %v1431 = vpop.f32.mrf.mxu0
        %v1432 = vpop.f32.mrf.mxu0
        %1433 = vdwg.mxu0
        %v1435 = vsel %vm1295, %v994, 0
        %v1438 = vsel %vm1295, %v1144, 0
        %1440 = vmatprep.subr.bf16.mxu0 0
        %1441 = vmatpush1.bf16.xpose.msra.mxu0 0
        %1442 = vmatprep.subr.bf16.mxu0 0
        %1443 = vmatpush1.bf16.xpose.msra.mxu0 0
        %1444 = vmatprep.subr.bf16.mxu0 0
        %1445 = vmatpush1.bf16.xpose.msra.mxu0 0
        %1446 = vmatprep.subr.bf16.mxu0 0
        %1447 = vmatpush1.bf16.xpose.msra.mxu0 0
        %1448 = vmatprep.subr.bf16.mxu0 0
        %1449 = vmatpush1.bf16.xpose.msra.mxu0 0
        %1450 = vmatprep.subr.bf16.mxu0 0
        %1451 = vmatpush1.bf16.xpose.msra.mxu0 0
        %1452 = vmatprep.subr.bf16.mxu0 0
        %1453 = vmatpush1.bf16.xpose.msra.mxu0 0
        %1454 = vmatprep.subr.bf16.mxu0 0
        %1455 = vmatpush1.bf16.xpose.msra.mxu0 %v1438
        %1456 = vmatprep.subr.bf16.mxu0 0
        %1457 = vmatpush2.bf16.xpose.msra.mxu0 0
        %1458 = vmatprep.subr.bf16.mxu0 0
        %1459 = vmatpush2.bf16.xpose.msra.mxu0 0
        %1460 = vmatprep.subr.bf16.mxu0 0
        %1461 = vmatpush2.bf16.xpose.msra.mxu0 0
        %1462 = vmatprep.subr.bf16.mxu0 0
        %1463 = vmatpush2.bf16.xpose.msra.mxu0 0
        %1464 = vmatprep.subr.bf16.mxu0 0
        %1465 = vmatpush2.bf16.xpose.msra.mxu0 0
        %1466 = vmatprep.subr.bf16.mxu0 0
        %1467 = vmatpush2.bf16.xpose.msra.mxu0 0
        %1468 = vmatprep.subr.bf16.mxu0 0
        %1469 = vmatpush2.bf16.xpose.msra.mxu0 0
        %1470 = vmatprep.subr.bf16.mxu0 0
        %1471 = vmatpush2.bf16.xpose.msra.mxu0 0
        %1472 = vmatprep.mubr.bf16.mxu0 0
        %1473 = vmatmul.mubr.bf16.gmra.mxu0 %v1435
        %v1474 = vpop.f32.mrf.mxu0
        %v1475 = vadd.f32 0.0, %v1474
        %v1476 = vpop.f32.mrf.mxu0
        %v1477 = vpop.f32.mrf.mxu0
        %v1478 = vpop.f32.mrf.mxu0
        %1479 = vdwg.mxu0
        %vm1480 = vcmask 64512
        %v1481 = vsel %vm1480, %v1337, -inf
        %1482 = vmax.xlane.f32.xlu0 %v1481
        %v1483 = vpop.xlane.xlu0 %1482
        %v1484 = vsel %vm1480, %v1383, -inf
        %1485 = vmax.xlane.f32.xlu0 %v1484
        %v1486 = vpop.xlane.xlu0 %1485
        %v1487 = vsel %vm1480, %v1429, -inf
        %1488 = vmax.xlane.f32.xlu0 %v1487
        %v1489 = vpop.xlane.xlu0 %1488
        %v1490 = vsel %vm1480, %v1475, -inf
        %1491 = vmax.xlane.f32.xlu0 %v1490
        %v1492 = vpop.xlane.xlu0 %1491
        %v1493 = vsub.f32 %v1337, %v1483
        %v1494 = vsub.f32 %v1383, %v1486
        %v1495 = vsub.f32 %v1429, %v1489
        %v1496 = vsub.f32 %v1475, %v1492
        %v1497 = vmul.f32 %v1493, 1.442695
        %v1498 = vpow.pop %v1497
        %v1499 = vmul.f32 %v1494, 1.442695
        %v1500 = vpow.pop %v1499
        %v1501 = vmul.f32 %v1495, 1.442695
        %v1502 = vpow.pop %v1501
        %v1503 = vmul.f32 %v1496, 1.442695
        %v1504 = vpow.pop %v1503
        %v1505 = vsel %vm1480, %v1498, 0.0
        %1506 = vadd.xlane.f32.xlu0 %v1505
        %v1507 = vpop.xlane.xlu0 %1506
        %v1508 = vsel %vm1480, %v1500, 0.0
        %1509 = vadd.xlane.f32.xlu0 %v1508
        %v1510 = vpop.xlane.xlu0 %1509
        %v1511 = vsel %vm1480, %v1502, 0.0
        %1512 = vadd.xlane.f32.xlu0 %v1511
        %v1513 = vpop.xlane.xlu0 %1512
        %v1514 = vsel %vm1480, %v1504, 0.0
        %1515 = vadd.xlane.f32.xlu0 %v1514
        %v1516 = vpop.xlane.xlu0 %1515
        %v1517 = vrcp.pop %v1507
        %v1518 = vrcp.pop %v1510
        %v1519 = vrcp.pop %v1513
        %v1520 = vrcp.pop %v1516
        %v1521 = vmul.f32 %v1498, %v1517
        %v1522 = vmul.f32 %v1500, %v1518
        %v1523 = vmul.f32 %v1502, %v1519
        %v1524 = vmul.f32 %v1504, %v1520
        %v1525 = vpack.c.bf16 %v1521, %v1521
        %v1526 = vpack.c.bf16 %v1522, %v1522
        %v1527 = vpack.c.bf16 %v1523, %v1523
        %v1528 = vpack.c.bf16 %v1524, %v1524
        %v1530 = vsel %vm1480, %v1525, 0
        %vm1532 = vcmask 1043456
        %v1534 = vsel %vm1532, %v1291, 0
        %1536 = vmatprep.subr.bf16.mxu0 0
        %1537 = vmatpush1.bf16.msra.mxu0 0
        %1538 = vmatprep.subr.bf16.mxu0 0
        %1539 = vmatpush1.bf16.msra.mxu0 0
        %1540 = vmatprep.subr.bf16.mxu0 0
        %1541 = vmatpush1.bf16.msra.mxu0 0
        %1542 = vmatprep.subr.bf16.mxu0 0
        %1543 = vmatpush1.bf16.msra.mxu0 0
        %1544 = vmatprep.subr.bf16.mxu0 0
        %1545 = vmatpush1.bf16.msra.mxu0 0
        %1546 = vmatprep.subr.bf16.mxu0 0
        %1547 = vmatpush1.bf16.msra.mxu0 0
        %1548 = vmatprep.subr.bf16.mxu0 0
        %1549 = vmatpush1.bf16.msra.mxu0 0
        %1550 = vmatprep.subr.bf16.mxu0 0
        %1551 = vmatpush1.bf16.msra.mxu0 %v1534
        %1552 = vmatprep.subr.bf16.mxu0 0
        %1553 = vmatpush2.bf16.msra.mxu0 0
        %1554 = vmatprep.subr.bf16.mxu0 0
        %1555 = vmatpush2.bf16.msra.mxu0 0
        %1556 = vmatprep.subr.bf16.mxu0 0
        %1557 = vmatpush2.bf16.msra.mxu0 0
        %1558 = vmatprep.subr.bf16.mxu0 0
        %1559 = vmatpush2.bf16.msra.mxu0 0
        %1560 = vmatprep.subr.bf16.mxu0 0
        %1561 = vmatpush2.bf16.msra.mxu0 0
        %1562 = vmatprep.subr.bf16.mxu0 0
        %1563 = vmatpush2.bf16.msra.mxu0 0
        %1564 = vmatprep.subr.bf16.mxu0 0
        %1565 = vmatpush2.bf16.msra.mxu0 0
        %1566 = vmatprep.subr.bf16.mxu0 0
        %1567 = vmatpush2.bf16.msra.mxu0 0
        %1568 = vmatprep.mubr.bf16.mxu0 0
        %1569 = vmatmul.mubr.bf16.gmra.mxu0 %v1530
        %v1570 = vpop.f32.mrf.mxu0
        %v1571 = vadd.f32 0.0, %v1570
        %v1572 = vpop.f32.mrf.mxu0
        %v1573 = vpop.f32.mrf.mxu0
        %v1574 = vpop.f32.mrf.mxu0
        %1575 = vdwg.mxu0
        %v1577 = vsel %vm1480, %v1526, 0
        %v1580 = vsel %vm1532, %v1292, 0
        %1582 = vmatprep.subr.bf16.mxu0 0
        %1583 = vmatpush1.bf16.msra.mxu0 0
        %1584 = vmatprep.subr.bf16.mxu0 0
        %1585 = vmatpush1.bf16.msra.mxu0 0
        %1586 = vmatprep.subr.bf16.mxu0 0
        %1587 = vmatpush1.bf16.msra.mxu0 0
        %1588 = vmatprep.subr.bf16.mxu0 0
        %1589 = vmatpush1.bf16.msra.mxu0 0
        %1590 = vmatprep.subr.bf16.mxu0 0
        %1591 = vmatpush1.bf16.msra.mxu0 0
        %1592 = vmatprep.subr.bf16.mxu0 0
        %1593 = vmatpush1.bf16.msra.mxu0 0
        %1594 = vmatprep.subr.bf16.mxu0 0
        %1595 = vmatpush1.bf16.msra.mxu0 0
        %1596 = vmatprep.subr.bf16.mxu0 0
        %1597 = vmatpush1.bf16.msra.mxu0 %v1580
        %1598 = vmatprep.subr.bf16.mxu0 0
        %1599 = vmatpush2.bf16.msra.mxu0 0
        %1600 = vmatprep.subr.bf16.mxu0 0
        %1601 = vmatpush2.bf16.msra.mxu0 0
        %1602 = vmatprep.subr.bf16.mxu0 0
        %1603 = vmatpush2.bf16.msra.mxu0 0
        %1604 = vmatprep.subr.bf16.mxu0 0
        %1605 = vmatpush2.bf16.msra.mxu0 0
        %1606 = vmatprep.subr.bf16.mxu0 0
        %1607 = vmatpush2.bf16.msra.mxu0 0
        %1608 = vmatprep.subr.bf16.mxu0 0
        %1609 = vmatpush2.bf16.msra.mxu0 0
        %1610 = vmatprep.subr.bf16.mxu0 0
        %1611 = vmatpush2.bf16.msra.mxu0 0
        %1612 = vmatprep.subr.bf16.mxu0 0
        %1613 = vmatpush2.bf16.msra.mxu0 0
        %1614 = vmatprep.mubr.bf16.mxu0 0
        %1615 = vmatmul.mubr.bf16.gmra.mxu0 %v1577
        %v1616 = vpop.f32.mrf.mxu0
        %v1617 = vadd.f32 0.0, %v1616
        %v1618 = vpop.f32.mrf.mxu0
        %v1619 = vpop.f32.mrf.mxu0
        %v1620 = vpop.f32.mrf.mxu0
        %1621 = vdwg.mxu0
        %v1623 = vsel %vm1480, %v1527, 0
        %v1626 = vsel %vm1532, %v1293, 0
        %1628 = vmatprep.subr.bf16.mxu0 0
        %1629 = vmatpush1.bf16.msra.mxu0 0
        %1630 = vmatprep.subr.bf16.mxu0 0
        %1631 = vmatpush1.bf16.msra.mxu0 0
        %1632 = vmatprep.subr.bf16.mxu0 0
        %1633 = vmatpush1.bf16.msra.mxu0 0
        %1634 = vmatprep.subr.bf16.mxu0 0
        %1635 = vmatpush1.bf16.msra.mxu0 0
        %1636 = vmatprep.subr.bf16.mxu0 0
        %1637 = vmatpush1.bf16.msra.mxu0 0
        %1638 = vmatprep.subr.bf16.mxu0 0
        %1639 = vmatpush1.bf16.msra.mxu0 0
        %1640 = vmatprep.subr.bf16.mxu0 0
        %1641 = vmatpush1.bf16.msra.mxu0 0
        %1642 = vmatprep.subr.bf16.mxu0 0
        %1643 = vmatpush1.bf16.msra.mxu0 %v1626
        %1644 = vmatprep.subr.bf16.mxu0 0
        %1645 = vmatpush2.bf16.msra.mxu0 0
        %1646 = vmatprep.subr.bf16.mxu0 0
        %1647 = vmatpush2.bf16.msra.mxu0 0
        %1648 = vmatprep.subr.bf16.mxu0 0
        %1649 = vmatpush2.bf16.msra.mxu0 0
        %1650 = vmatprep.subr.bf16.mxu0 0
        %1651 = vmatpush2.bf16.msra.mxu0 0
        %1652 = vmatprep.subr.bf16.mxu0 0
        %1653 = vmatpush2.bf16.msra.mxu0 0
        %1654 = vmatprep.subr.bf16.mxu0 0
        %1655 = vmatpush2.bf16.msra.mxu0 0
        %1656 = vmatprep.subr.bf16.mxu0 0
        %1657 = vmatpush2.bf16.msra.mxu0 0
        %1658 = vmatprep.subr.bf16.mxu0 0
        %1659 = vmatpush2.bf16.msra.mxu0 0
        %1660 = vmatprep.mubr.bf16.mxu0 0
        %1661 = vmatmul.mubr.bf16.gmra.mxu0 %v1623
        %v1662 = vpop.f32.mrf.mxu0
        %v1663 = vadd.f32 0.0, %v1662
        %v1664 = vpop.f32.mrf.mxu0
        %v1665 = vpop.f32.mrf.mxu0
        %v1666 = vpop.f32.mrf.mxu0
        %1667 = vdwg.mxu0
        %v1669 = vsel %vm1480, %v1528, 0
        %v1672 = vsel %vm1532, %v1294, 0
        %1674 = vmatprep.subr.bf16.mxu0 0
        %1675 = vmatpush1.bf16.msra.mxu0 0
        %1676 = vmatprep.subr.bf16.mxu0 0
        %1677 = vmatpush1.bf16.msra.mxu0 0
        %1678 = vmatprep.subr.bf16.mxu0 0
        %1679 = vmatpush1.bf16.msra.mxu0 0
        %1680 = vmatprep.subr.bf16.mxu0 0
        %1681 = vmatpush1.bf16.msra.mxu0 0
        %1682 = vmatprep.subr.bf16.mxu0 0
        %1683 = vmatpush1.bf16.msra.mxu0 0
        %1684 = vmatprep.subr.bf16.mxu0 0
        %1685 = vmatpush1.bf16.msra.mxu0 0
        %1686 = vmatprep.subr.bf16.mxu0 0
        %1687 = vmatpush1.bf16.msra.mxu0 0
        %1688 = vmatprep.subr.bf16.mxu0 0
        %1689 = vmatpush1.bf16.msra.mxu0 %v1672
        %1690 = vmatprep.subr.bf16.mxu0 0
        %1691 = vmatpush2.bf16.msra.mxu0 0
        %1692 = vmatprep.subr.bf16.mxu0 0
        %1693 = vmatpush2.bf16.msra.mxu0 0
        %1694 = vmatprep.subr.bf16.mxu0 0
        %1695 = vmatpush2.bf16.msra.mxu0 0
        %1696 = vmatprep.subr.bf16.mxu0 0
        %1697 = vmatpush2.bf16.msra.mxu0 0
        %1698 = vmatprep.subr.bf16.mxu0 0
        %1699 = vmatpush2.bf16.msra.mxu0 0
        %1700 = vmatprep.subr.bf16.mxu0 0
        %1701 = vmatpush2.bf16.msra.mxu0 0
        %1702 = vmatprep.subr.bf16.mxu0 0
        %1703 = vmatpush2.bf16.msra.mxu0 0
        %1704 = vmatprep.subr.bf16.mxu0 0
        %1705 = vmatpush2.bf16.msra.mxu0 0
        %1706 = vmatprep.mubr.bf16.mxu0 0
        %1707 = vmatmul.mubr.bf16.gmra.mxu0 %v1669
        %v1708 = vpop.f32.mrf.mxu0
        %v1709 = vadd.f32 0.0, %v1708
        %v1710 = vpop.f32.mrf.mxu0
        %v1711 = vpop.f32.mrf.mxu0
        %v1712 = vpop.f32.mrf.mxu0
        %1713 = vdwg.mxu0
        %v1714 = vcombine.low %v1571, %v1663
        %v1715 = vcombine.high %v1571, %v1663
        %v1717 = vunpack.c.l.s4 1983009808
        %v1718 = vunpack.c.0.s8 %v1717
        %v1719 = vlaneseq
        %v1720 = vshrl.u32 %v1719, 7
        %v1721 = vsub.s32 %v1718, %v1720
        %v1722 = vrot.slane %v1714, %v1721
        %v1724 = vunpack.c.l.s4 1983009808
        %v1725 = vunpack.c.0.s8 %v1724
        %v1726 = vlaneseq
        %v1727 = vshrl.u32 %v1726, 7
        %v1728 = vsub.s32 %v1725, %v1727
        %v1729 = vrot.slane %v1715, %v1728
        %v1730 = vcombine.low %v1617, %v1709
        %v1731 = vcombine.high %v1617, %v1709
        %v1733 = vunpack.c.l.s4 1983009808
        %v1734 = vunpack.c.0.s8 %v1733
        %v1735 = vlaneseq
        %v1736 = vshrl.u32 %v1735, 7
        %v1737 = vsub.s32 %v1734, %v1736
        %v1738 = vrot.slane %v1730, %v1737
        %v1740 = vunpack.c.l.s4 1983009808
        %v1741 = vunpack.c.0.s8 %v1740
        %v1742 = vlaneseq
        %v1743 = vshrl.u32 %v1742, 7
        %v1744 = vsub.s32 %v1741, %v1743
        %v1745 = vrot.slane %v1731, %v1744
        %v1746 = vcombine.low %v1722, %v1738
        %v1747 = vcombine.high %v1722, %v1738
        %v1749 = vunpack.c.l.s4 1934713408
        %v1750 = vunpack.c.0.s8 %v1749
        %v1751 = vlaneseq
        %v1752 = vshrl.u32 %v1751, 7
        %v1753 = vsub.s32 %v1750, %v1752
        %v1754 = vrot.slane %v1746, %v1753
        %v1756 = vunpack.c.l.s4 1934713408
        %v1757 = vunpack.c.0.s8 %v1756
        %v1758 = vlaneseq
        %v1759 = vshrl.u32 %v1758, 7
        %v1760 = vsub.s32 %v1757, %v1759
        %v1761 = vrot.slane %v1747, %v1760
        %v1762 = vcombine.low %v1729, %v1745
        %v1763 = vcombine.high %v1729, %v1745
        %v1765 = vunpack.c.l.s4 1934713408
        %v1766 = vunpack.c.0.s8 %v1765
        %v1767 = vlaneseq
        %v1768 = vshrl.u32 %v1767, 7
        %v1769 = vsub.s32 %v1766, %v1768
        %v1770 = vrot.slane %v1762, %v1769
        %v1772 = vunpack.c.l.s4 1934713408
        %v1773 = vunpack.c.0.s8 %v1772
        %v1774 = vlaneseq
        %v1775 = vshrl.u32 %v1774, 7
        %v1776 = vsub.s32 %v1773, %v1775
        %v1777 = vrot.slane %v1763, %v1776
        %v1778 = vcombine.high %v1754, 0.0
        %v1779 = vcombine.high %v1761, 0.0
        %v1780 = vcombine.high %v1770, 0.0
        %v1781 = vcombine.high %v1777, 0.0
        %v1782 = vcombine.low %v1754, %v1761
        %v1784 = vunpack.c.l.s4 1983009808
        %v1785 = vunpack.c.0.s8 %v1784
        %v1786 = vlaneseq
        %v1787 = vshrl.u32 %v1786, 7
        %v1788 = vsub.s32 %v1785, %v1787
        %v1789 = vrot.slane %v1782, %v1788
        %v1790 = vcombine.low %v1778, %v1779
        %v1792 = vunpack.c.l.s4 1983009808
        %v1793 = vunpack.c.0.s8 %v1792
        %v1794 = vlaneseq
        %v1795 = vshrl.u32 %v1794, 7
        %v1796 = vsub.s32 %v1793, %v1795
        %v1797 = vrot.slane %v1790, %v1796
        %v1798 = vcombine.low %v1770, %v1777
        %v1800 = vunpack.c.l.s4 1983009808
        %v1801 = vunpack.c.0.s8 %v1800
        %v1802 = vlaneseq
        %v1803 = vshrl.u32 %v1802, 7
        %v1804 = vsub.s32 %v1801, %v1803
        %v1805 = vrot.slane %v1798, %v1804
        %v1806 = vcombine.low %v1780, %v1781
        %v1808 = vunpack.c.l.s4 1983009808
        %v1809 = vunpack.c.0.s8 %v1808
        %v1810 = vlaneseq
        %v1811 = vshrl.u32 %v1810, 7
        %v1812 = vsub.s32 %v1809, %v1811
        %v1813 = vrot.slane %v1806, %v1812
        %v1814 = vcombine.low %v1789, %v1797
        %v1815 = vcombine.high %v1789, %v1797
        %v1817 = vunpack.c.l.s4 1934713408
        %v1818 = vunpack.c.0.s8 %v1817
        %v1819 = vlaneseq
        %v1820 = vshrl.u32 %v1819, 7
        %v1821 = vsub.s32 %v1818, %v1820
        %v1822 = vrot.slane %v1814, %v1821
        %v1824 = vunpack.c.l.s4 1934713408
        %v1825 = vunpack.c.0.s8 %v1824
        %v1826 = vlaneseq
        %v1827 = vshrl.u32 %v1826, 7
        %v1828 = vsub.s32 %v1825, %v1827
        %v1829 = vrot.slane %v1815, %v1828
        %v1830 = vcombine.low %v1805, %v1813
        %v1831 = vcombine.high %v1805, %v1813
        %v1833 = vunpack.c.l.s4 1934713408
        %v1834 = vunpack.c.0.s8 %v1833
        %v1835 = vlaneseq
        %v1836 = vshrl.u32 %v1835, 7
        %v1837 = vsub.s32 %v1834, %v1836
        %v1838 = vrot.slane %v1830, %v1837
        %v1840 = vunpack.c.l.s4 1934713408
        %v1841 = vunpack.c.0.s8 %v1840
        %v1842 = vlaneseq
        %v1843 = vshrl.u32 %v1842, 7
        %v1844 = vsub.s32 %v1841, %v1843
        %v1845 = vrot.slane %v1831, %v1844
        %v1846 = vcombine.low %v1822, %v1838
        %v1847 = vcombine.high %v1822, %v1838
        %v1848 = vcombine.low %v1829, %v1845
        %v1849 = vcombine.high %v1829, %v1845
        %1851 = vrot.lane.b32.xlu0 %v1847, 32
        %v1852 = vpop.permute.xlu0 %1851
        %1855 = vrot.lane.b32.xlu0 %v1848, 64
        %v1856 = vpop.permute.xlu0 %1855
        %1859 = vrot.lane.b32.xlu0 %v1849, 96
        %v1860 = vpop.permute.xlu0 %1859
        %v1862 = vsel %vm1295, %v1846, %v1852
        %vm1863 = vcmask 523264
        %v1864 = vsel %vm1863, %v1862, %v1856
        %vm1865 = vcmask 785408
        %v1866 = vsel %vm1865, %v1864, %v1860
        %v1867 = vpack.c.bf16 %v1866, %v1866
        %v1868 = vld [vmem:[%s478] sm:$0xf]
        %v1869 = vld [vmem:[%s478 + $0x4] sm:$0xf]
        %v1870 = vld [vmem:[%s478 + $0x8] sm:$0xf]
        %v1871 = vld [vmem:[%s478 + $0xc] sm:$0xf]
        %v1872 = vld [vmem:[%s478 + $0x10] sm:$0xf]
        %v1873 = vld [vmem:[%s478 + $0x14] sm:$0xf]
        %v1874 = vld [vmem:[%s478 + $0x18] sm:$0xf]
        %v1875 = vld [vmem:[%s478 + $0x1c] sm:$0xf]
        %v1876 = vld [vmem:[%s478 + $0x20] sm:$0xf]
        %v1877 = vld [vmem:[%s478 + $0x24] sm:$0xf]
        %v1878 = vld [vmem:[%s478 + $0x28] sm:$0xf]
        %v1879 = vld [vmem:[%s478 + $0x2c] sm:$0xf]
        %v1880 = vld [vmem:[%s478 + $0x30] sm:$0xf]
        %v1881 = vld [vmem:[%s478 + $0x34] sm:$0xf]
        %v1882 = vld [vmem:[%s478 + $0x38] sm:$0xf]
        %v1883 = vld [vmem:[%s478 + $0x3c] sm:$0xf]
        %v1884 = vlaneseq
        %v1885 = vshrl.u32 %v1884, 7
        %v1886 = vsub.s32 0, %v1885
        %v1887 = vrot.slane %v585, %v1886
        %v1904 = vunpack.c.l.b16 %v1868
        %v1905 = vunpack.c.l.b16 %v1869
        %v1906 = vunpack.c.l.b16 %v1870
        %v1907 = vunpack.c.l.b16 %v1871
        %v1908 = vunpack.c.l.b16 %v1872
        %v1909 = vunpack.c.l.b16 %v1873
        %v1910 = vunpack.c.l.b16 %v1874
        %v1911 = vunpack.c.l.b16 %v1875
        %v1912 = vunpack.c.l.b16 %v1876
        %v1913 = vunpack.c.l.b16 %v1877
        %v1914 = vunpack.c.l.b16 %v1878
        %v1915 = vunpack.c.l.b16 %v1879
        %v1916 = vunpack.c.l.b16 %v1880
        %v1917 = vunpack.c.l.b16 %v1881
        %v1918 = vunpack.c.l.b16 %v1882
        %v1919 = vunpack.c.l.b16 %v1883
        %v1920 = vpack.c.b16 %v1905, %v1904
        %v1921 = vpack.c.b16 %v1907, %v1906
        %v1922 = vpack.c.b16 %v1909, %v1908
        %v1923 = vpack.c.b16 %v1911, %v1910
        %v1924 = vpack.c.b16 %v1913, %v1912
        %v1925 = vpack.c.b16 %v1915, %v1914
        %v1926 = vpack.c.b16 %v1917, %v1916
        %v1927 = vpack.c.b16 %v1919, %v1918
        %1936 = vmatprep.subr.bf16.mxu0 0
        %1937 = vmatpush1.bf16.msra.mxu0 %v1927
        %1938 = vmatprep.subr.bf16.mxu0 0
        %1939 = vmatpush1.bf16.msra.mxu0 %v1926
        %1940 = vmatprep.subr.bf16.mxu0 0
        %1941 = vmatpush1.bf16.msra.mxu0 %v1925
        %1942 = vmatprep.subr.bf16.mxu0 0
        %1943 = vmatpush1.bf16.msra.mxu0 %v1924
        %1944 = vmatprep.subr.bf16.mxu0 0
        %1945 = vmatpush1.bf16.msra.mxu0 %v1923
        %1946 = vmatprep.subr.bf16.mxu0 0
        %1947 = vmatpush1.bf16.msra.mxu0 %v1922
        %1948 = vmatprep.subr.bf16.mxu0 0
        %1949 = vmatpush1.bf16.msra.mxu0 %v1921
        %1950 = vmatprep.subr.bf16.mxu0 0
        %1951 = vmatpush1.bf16.msra.mxu0 %v1920
        %1952 = vmatprep.subr.bf16.mxu0 0
        %1953 = vmatpush2.bf16.msra.mxu0 0
        %1954 = vmatprep.subr.bf16.mxu0 0
        %1955 = vmatpush2.bf16.msra.mxu0 0
        %1956 = vmatprep.subr.bf16.mxu0 0
        %1957 = vmatpush2.bf16.msra.mxu0 0
        %1958 = vmatprep.subr.bf16.mxu0 0
        %1959 = vmatpush2.bf16.msra.mxu0 0
        %1960 = vmatprep.subr.bf16.mxu0 0
        %1961 = vmatpush2.bf16.msra.mxu0 0
        %1962 = vmatprep.subr.bf16.mxu0 0
        %1963 = vmatpush2.bf16.msra.mxu0 0
        %1964 = vmatprep.subr.bf16.mxu0 0
        %1965 = vmatpush2.bf16.msra.mxu0 0
        %1966 = vmatprep.subr.bf16.mxu0 0
        %1967 = vmatpush2.bf16.msra.mxu0 0
        %1968 = vmatprep.mubr.bf16.mxu0 0
        %1969 = vmatmul.mubr.bf16.gmra.mxu0 %v1867
        %v1970 = vpop.f32.mrf.mxu0
        %v1971 = vadd.f32 %v1887, %v1970
        %v1972 = vpop.f32.mrf.mxu0
        %v1973 = vpop.f32.mrf.mxu0
        %v1974 = vpop.f32.mrf.mxu0
        %1975 = vdwg.mxu0
        %v1976 = vadd.f32 %v583, %v1971
        %1977 = vadd.xlane.f32.xlu0 %v1976
        %v1978 = vpop.xlane.xlu0 %1977
        %v1979 = vrcp.pop 128.0
        %v1980 = vmul.f32 %v1978, %v1979
        %v1981 = vsub.f32 %v1976, %v1980
        %v1982 = vmul.f32 %v1981, %v1981
        %1983 = vadd.xlane.f32.xlu0 %v1982
        %v1984 = vpop.xlane.xlu0 %1983
        %v1985 = vmul.f32 %v1984, %v1979
        %v1986 = vadd.f32 %v1985, 1e-05
        %v1987 = vrsqrt.pop %v1986
        %v1988 = vmul.f32 %v1981, %v1987
        %v1989 = vlaneseq
        %v1990 = vshrl.u32 %v1989, 7
        %v1991 = vsub.s32 1, %v1990
        %v1992 = vrot.slane %v585, %v1991
        %v1993 = vmul.f32 %v1988, %v1992
        %v1994 = vlaneseq
        %v1995 = vshrl.u32 %v1994, 7
        %v1996 = vsub.s32 2, %v1995
        %v1997 = vrot.slane %v585, %v1996
        %v1998 = vadd.f32 %v1993, %v1997
        %v1999 = vpack.c.bf16 %v1998, %v1998
        %v2000 = vld [vmem:[%s487] sm:$0xff]
        %v2001 = vld [vmem:[%s487 + $0x8] sm:$0xff]
        %v2002 = vld [vmem:[%s487 + $0x10] sm:$0xff]
        %v2003 = vld [vmem:[%s487 + $0x18] sm:$0xff]
        %v2004 = vld [vmem:[%s487 + $0x20] sm:$0xff]
        %v2005 = vld [vmem:[%s487 + $0x28] sm:$0xff]
        %v2006 = vld [vmem:[%s487 + $0x30] sm:$0xff]
        %v2007 = vld [vmem:[%s487 + $0x38] sm:$0xff]
        %v2008 = vld [vmem:[%s487 + $0x40] sm:$0xff]
        %v2009 = vld [vmem:[%s487 + $0x48] sm:$0xff]
        %v2010 = vld [vmem:[%s487 + $0x50] sm:$0xff]
        %v2011 = vld [vmem:[%s487 + $0x58] sm:$0xff]
        %v2012 = vld [vmem:[%s487 + $0x60] sm:$0xff]
        %v2013 = vld [vmem:[%s487 + $0x68] sm:$0xff]
        %v2014 = vld [vmem:[%s487 + $0x70] sm:$0xff]
        %v2015 = vld [vmem:[%s487 + $0x78] sm:$0xff]
        %v2016 = vld [vmem:[%s575] sm:$0x3]
        %v2018 = vlaneseq
        %v2019 = vshrl.u32 %v2018, 7
        %v2020 = vsub.s32 0, %v2019
        %v2021 = vrot.slane %v2016, %v2020
        %v2022 = vlaneseq
        %v2023 = vshrl.u32 %v2022, 7
        %v2024 = vsub.s32 1, %v2023
        %v2025 = vrot.slane %v2016, %v2024
        %v2044 = vunpack.c.l.b16 %v2000
        %v2045 = vunpack.c.h.b16 %v2000
        %v2046 = vunpack.c.l.b16 %v2001
        %v2047 = vunpack.c.h.b16 %v2001
        %v2048 = vunpack.c.l.b16 %v2002
        %v2049 = vunpack.c.h.b16 %v2002
        %v2050 = vunpack.c.l.b16 %v2003
        %v2051 = vunpack.c.h.b16 %v2003
        %v2052 = vunpack.c.l.b16 %v2004
        %v2053 = vunpack.c.h.b16 %v2004
        %v2054 = vunpack.c.l.b16 %v2005
        %v2055 = vunpack.c.h.b16 %v2005
        %v2056 = vunpack.c.l.b16 %v2006
        %v2057 = vunpack.c.h.b16 %v2006
        %v2058 = vunpack.c.l.b16 %v2007
        %v2059 = vunpack.c.h.b16 %v2007
        %v2060 = vunpack.c.l.b16 %v2008
        %v2061 = vunpack.c.h.b16 %v2008
        %v2062 = vunpack.c.l.b16 %v2009
        %v2063 = vunpack.c.h.b16 %v2009
        %v2064 = vunpack.c.l.b16 %v2010
        %v2065 = vunpack.c.h.b16 %v2010
        %v2066 = vunpack.c.l.b16 %v2011
        %v2067 = vunpack.c.h.b16 %v2011
        %v2068 = vunpack.c.l.b16 %v2012
        %v2069 = vunpack.c.h.b16 %v2012
        %v2070 = vunpack.c.l.b16 %v2013
        %v2071 = vunpack.c.h.b16 %v2013
        %v2072 = vunpack.c.l.b16 %v2014
        %v2073 = vunpack.c.h.b16 %v2014
        %v2074 = vunpack.c.l.b16 %v2015
        %v2075 = vunpack.c.h.b16 %v2015
        %v2076 = vpack.c.b16 %v2046, %v2044
        %v2077 = vpack.c.b16 %v2047, %v2045
        %v2078 = vpack.c.b16 %v2050, %v2048
        %v2079 = vpack.c.b16 %v2051, %v2049
        %v2080 = vpack.c.b16 %v2054, %v2052
        %v2081 = vpack.c.b16 %v2055, %v2053
        %v2082 = vpack.c.b16 %v2058, %v2056
        %v2083 = vpack.c.b16 %v2059, %v2057
        %v2084 = vpack.c.b16 %v2062, %v2060
        %v2085 = vpack.c.b16 %v2063, %v2061
        %v2086 = vpack.c.b16 %v2066, %v2064
        %v2087 = vpack.c.b16 %v2067, %v2065
        %v2088 = vpack.c.b16 %v2070, %v2068
        %v2089 = vpack.c.b16 %v2071, %v2069
        %v2090 = vpack.c.b16 %v2074, %v2072
        %v2091 = vpack.c.b16 %v2075, %v2073
        %2108 = vmatprep.subr.bf16.mxu0 %v2091
        %2109 = vmatpush1.bf16.msra.mxu0 %v2090
        %2110 = vmatprep.subr.bf16.mxu0 %v2089
        %2111 = vmatpush1.bf16.msra.mxu0 %v2088
        %2112 = vmatprep.subr.bf16.mxu0 %v2087
        %2113 = vmatpush1.bf16.msra.mxu0 %v2086
        %2114 = vmatprep.subr.bf16.mxu0 %v2085
        %2115 = vmatpush1.bf16.msra.mxu0 %v2084
        %2116 = vmatprep.subr.bf16.mxu0 %v2083
        %2117 = vmatpush1.bf16.msra.mxu0 %v2082
        %2118 = vmatprep.subr.bf16.mxu0 %v2081
        %2119 = vmatpush1.bf16.msra.mxu0 %v2080
        %2120 = vmatprep.subr.bf16.mxu0 %v2079
        %2121 = vmatpush1.bf16.msra.mxu0 %v2078
        %2122 = vmatprep.subr.bf16.mxu0 %v2077
        %2123 = vmatpush1.bf16.msra.mxu0 %v2076
        %2124 = vmatprep.subr.bf16.mxu0 0
        %2125 = vmatpush2.bf16.msra.mxu0 0
        %2126 = vmatprep.subr.bf16.mxu0 0
        %2127 = vmatpush2.bf16.msra.mxu0 0
        %2128 = vmatprep.subr.bf16.mxu0 0
        %2129 = vmatpush2.bf16.msra.mxu0 0
        %2130 = vmatprep.subr.bf16.mxu0 0
        %2131 = vmatpush2.bf16.msra.mxu0 0
        %2132 = vmatprep.subr.bf16.mxu0 0
        %2133 = vmatpush2.bf16.msra.mxu0 0
        %2134 = vmatprep.subr.bf16.mxu0 0
        %2135 = vmatpush2.bf16.msra.mxu0 0
        %2136 = vmatprep.subr.bf16.mxu0 0
        %2137 = vmatpush2.bf16.msra.mxu0 0
        %2138 = vmatprep.subr.bf16.mxu0 0
        %2139 = vmatpush2.bf16.msra.mxu0 0
        %2140 = vmatprep.mubr.bf16.mxu0 0
        %2141 = vmatmul.mubr.bf16.gmra.mxu0 %v1999
        %v2142 = vpop.f32.mrf.mxu0
        %v2143 = vadd.f32 %v2021, %v2142
        %v2144 = vpop.f32.mrf.mxu0
        %v2145 = vadd.f32 %v2025, %v2144
        %v2146 = vpop.f32.mrf.mxu0
        %v2147 = vpop.f32.mrf.mxu0
        %2148 = vdwg.mxu0
        %v2149 = vxor.u32 %v2143, 2147483648
        %v2150 = vxor.u32 %v2145, 2147483648
        %v2151 = vmul.f32 %v2149, 1.442695
        %v2152 = vpow.pop %v2151
        %v2153 = vmul.f32 %v2150, 1.442695
        %v2154 = vpow.pop %v2153
        %v2155 = vadd.f32 %v2152, 1.0
        %v2156 = vadd.f32 %v2154, 1.0
        %v2157 = vrcp.pop %v2155
        %v2158 = vmul.f32 1.0, %v2157
        %v2159 = vrcp.pop %v2156
        %v2160 = vmul.f32 1.0, %v2159
        %v2161 = vmul.f32 %v2143, %v2158
        %v2162 = vmul.f32 %v2145, %v2160
        %v2163 = vpack.c.bf16 %v2161, %v2161
        %v2164 = vpack.c.bf16 %v2162, %v2162
        %v2165 = vld [vmem:[%s496] sm:$0xf]
        %v2166 = vld [vmem:[%s496 + $0x4] sm:$0xf]
        %v2167 = vld [vmem:[%s496 + $0x8] sm:$0xf]
        %v2168 = vld [vmem:[%s496 + $0xc] sm:$0xf]
        %v2169 = vld [vmem:[%s496 + $0x10] sm:$0xf]
        %v2170 = vld [vmem:[%s496 + $0x14] sm:$0xf]
        %v2171 = vld [vmem:[%s496 + $0x18] sm:$0xf]
        %v2172 = vld [vmem:[%s496 + $0x1c] sm:$0xf]
        %v2173 = vld [vmem:[%s496 + $0x20] sm:$0xf]
        %v2174 = vld [vmem:[%s496 + $0x24] sm:$0xf]
        %v2175 = vld [vmem:[%s496 + $0x28] sm:$0xf]
        %v2176 = vld [vmem:[%s496 + $0x2c] sm:$0xf]
        %v2177 = vld [vmem:[%s496 + $0x30] sm:$0xf]
        %v2178 = vld [vmem:[%s496 + $0x34] sm:$0xf]
        %v2179 = vld [vmem:[%s496 + $0x38] sm:$0xf]
        %v2180 = vld [vmem:[%s496 + $0x3c] sm:$0xf]
        %v2181 = vld [vmem:[%s496 + $0x40] sm:$0xf]
        %v2182 = vld [vmem:[%s496 + $0x44] sm:$0xf]
        %v2183 = vld [vmem:[%s496 + $0x48] sm:$0xf]
        %v2184 = vld [vmem:[%s496 + $0x4c] sm:$0xf]
        %v2185 = vld [vmem:[%s496 + $0x50] sm:$0xf]
        %v2186 = vld [vmem:[%s496 + $0x54] sm:$0xf]
        %v2187 = vld [vmem:[%s496 + $0x58] sm:$0xf]
        %v2188 = vld [vmem:[%s496 + $0x5c] sm:$0xf]
        %v2189 = vld [vmem:[%s496 + $0x60] sm:$0xf]
        %v2190 = vld [vmem:[%s496 + $0x64] sm:$0xf]
        %v2191 = vld [vmem:[%s496 + $0x68] sm:$0xf]
        %v2192 = vld [vmem:[%s496 + $0x6c] sm:$0xf]
        %v2193 = vld [vmem:[%s496 + $0x70] sm:$0xf]
        %v2194 = vld [vmem:[%s496 + $0x74] sm:$0xf]
        %v2195 = vld [vmem:[%s496 + $0x78] sm:$0xf]
        %v2196 = vld [vmem:[%s496 + $0x7c] sm:$0xf]
        %v2197 = vlaneseq
        %v2198 = vshrl.u32 %v2197, 7
        %v2199 = vsub.s32 3, %v2198
        %v2200 = vrot.slane %v585, %v2199
        %v2233 = vunpack.c.l.b16 %v2165
        %v2234 = vunpack.c.l.b16 %v2166
        %v2235 = vunpack.c.l.b16 %v2167
        %v2236 = vunpack.c.l.b16 %v2168
        %v2237 = vunpack.c.l.b16 %v2169
        %v2238 = vunpack.c.l.b16 %v2170
        %v2239 = vunpack.c.l.b16 %v2171
        %v2240 = vunpack.c.l.b16 %v2172
        %v2241 = vunpack.c.l.b16 %v2173
        %v2242 = vunpack.c.l.b16 %v2174
        %v2243 = vunpack.c.l.b16 %v2175
        %v2244 = vunpack.c.l.b16 %v2176
        %v2245 = vunpack.c.l.b16 %v2177
        %v2246 = vunpack.c.l.b16 %v2178
        %v2247 = vunpack.c.l.b16 %v2179
        %v2248 = vunpack.c.l.b16 %v2180
        %v2249 = vunpack.c.l.b16 %v2181
        %v2250 = vunpack.c.l.b16 %v2182
        %v2251 = vunpack.c.l.b16 %v2183
        %v2252 = vunpack.c.l.b16 %v2184
        %v2253 = vunpack.c.l.b16 %v2185
        %v2254 = vunpack.c.l.b16 %v2186
        %v2255 = vunpack.c.l.b16 %v2187
        %v2256 = vunpack.c.l.b16 %v2188
        %v2257 = vunpack.c.l.b16 %v2189
        %v2258 = vunpack.c.l.b16 %v2190
        %v2259 = vunpack.c.l.b16 %v2191
        %v2260 = vunpack.c.l.b16 %v2192
        %v2261 = vunpack.c.l.b16 %v2193
        %v2262 = vunpack.c.l.b16 %v2194
        %v2263 = vunpack.c.l.b16 %v2195
        %v2264 = vunpack.c.l.b16 %v2196
        %v2265 = vpack.c.b16 %v2234, %v2233
        %v2266 = vpack.c.b16 %v2236, %v2235
        %v2267 = vpack.c.b16 %v2238, %v2237
        %v2268 = vpack.c.b16 %v2240, %v2239
        %v2269 = vpack.c.b16 %v2242, %v2241
        %v2270 = vpack.c.b16 %v2244, %v2243
        %v2271 = vpack.c.b16 %v2246, %v2245
        %v2272 = vpack.c.b16 %v2248, %v2247
        %v2273 = vpack.c.b16 %v2250, %v2249
        %v2274 = vpack.c.b16 %v2252, %v2251
        %v2275 = vpack.c.b16 %v2254, %v2253
        %v2276 = vpack.c.b16 %v2256, %v2255
        %v2277 = vpack.c.b16 %v2258, %v2257
        %v2278 = vpack.c.b16 %v2260, %v2259
        %v2279 = vpack.c.b16 %v2262, %v2261
        %v2280 = vpack.c.b16 %v2264, %v2263
        %2297 = vmatprep.subr.bf16.mxu0 0
        %2298 = vmatpush1.bf16.msra.mxu0 %v2272
        %2299 = vmatprep.subr.bf16.mxu0 0
        %2300 = vmatpush1.bf16.msra.mxu0 %v2271
        %2301 = vmatprep.subr.bf16.mxu0 0
        %2302 = vmatpush1.bf16.msra.mxu0 %v2270
        %2303 = vmatprep.subr.bf16.mxu0 0
        %2304 = vmatpush1.bf16.msra.mxu0 %v2269
        %2305 = vmatprep.subr.bf16.mxu0 0
        %2306 = vmatpush1.bf16.msra.mxu0 %v2268
        %2307 = vmatprep.subr.bf16.mxu0 0
        %2308 = vmatpush1.bf16.msra.mxu0 %v2267
        %2309 = vmatprep.subr.bf16.mxu0 0
        %2310 = vmatpush1.bf16.msra.mxu0 %v2266
        %2311 = vmatprep.subr.bf16.mxu0 0
        %2312 = vmatpush1.bf16.msra.mxu0 %v2265
        %2313 = vmatprep.subr.bf16.mxu0 0
        %2314 = vmatpush2.bf16.msra.mxu0 %v2280
        %2315 = vmatprep.subr.bf16.mxu0 0
        %2316 = vmatpush2.bf16.msra.mxu0 %v2279
        %2317 = vmatprep.subr.bf16.mxu0 0
        %2318 = vmatpush2.bf16.msra.mxu0 %v2278
        %2319 = vmatprep.subr.bf16.mxu0 0
        %2320 = vmatpush2.bf16.msra.mxu0 %v2277
        %2321 = vmatprep.subr.bf16.mxu0 0
        %2322 = vmatpush2.bf16.msra.mxu0 %v2276
        %2323 = vmatprep.subr.bf16.mxu0 0
        %2324 = vmatpush2.bf16.msra.mxu0 %v2275
        %2325 = vmatprep.subr.bf16.mxu0 0
        %2326 = vmatpush2.bf16.msra.mxu0 %v2274
        %2327 = vmatprep.subr.bf16.mxu0 0
        %2328 = vmatpush2.bf16.msra.mxu0 %v2273
        %2329 = vmatprep.mubr.bf16.mxu0 %v2164
        %2330 = vmatmul.mubr.bf16.gmra.mxu0 %v2163
        %v2331 = vpop.f32.mrf.mxu0
        %v2332 = vadd.f32 %v2200, %v2331
        %v2333 = vpop.f32.mrf.mxu0
        %v2334 = vpop.f32.mrf.mxu0
        %v2335 = vpop.f32.mrf.mxu0
        %2336 = vdwg.mxu0
        %v2337 = vadd.f32 %v1998, %v2332
        %2338 = vadd.xlane.f32.xlu0 %v2337
        %v2339 = vpop.xlane.xlu0 %2338
        %v2340 = vmul.f32 %v2339, %v1979
        %v2341 = vsub.f32 %v2337, %v2340
        %v2342 = vmul.f32 %v2341, %v2341
        %2343 = vadd.xlane.f32.xlu0 %v2342
        %v2344 = vpop.xlane.xlu0 %2343
        %v2345 = vmul.f32 %v2344, %v1979
        %v2346 = vadd.f32 %v2345, 1e-05
        %v2347 = vrsqrt.pop %v2346
        %v2348 = vmul.f32 %v2341, %v2347
        %v2349 = vlaneseq
        %v2350 = vshrl.u32 %v2349, 7
        %v2351 = vsub.s32 4, %v2350
        %v2352 = vrot.slane %v585, %v2351
        %v2353 = vmul.f32 %v2348, %v2352
        %v2354 = vlaneseq
        %v2355 = vshrl.u32 %v2354, 7
        %v2356 = vsub.s32 5, %v2355
        %v2357 = vrot.slane %v585, %v2356
        %v2358 = vadd.f32 %v2353, %v2357
        %2359 = vst [vmem:[%s571] sm:$0xff] %v2358
        %s2360 = sand.u32 %s262, 1
        %s2361 = scalar_lea.sflag [#allocation4], %s2360
        %s2362 = sand.u32 %s262, 1
        %s2363 = smul.addr %s2362, 8
        %s2364 = scalar_lea.vmem [#allocation14], %s2363
        // Predicated region
        $region85: #{tpu_custom_call.1} parent=51 // pred_check
          %p2365 = pneg %p272
        $region86: #{tpu_custom_call.1} parent=51 // pred_check_branch
          %2367 = sbr.rel (%p2365) target = $region88
        $region87: #{tpu_custom_call.1} parent=51 // pred_region
          %s2369 = ssub.s32 128, 128
          %2370 = vsyncadd %s2361, %s2369
          %s2371 = smul.addr %s38, 128
          %s2372 = scalar_lea.hbm %s8, %s2371
          %s2374 = sshll.u32 %s2364, 4
          %s2375 = int_to_ptr.vmem [resolvable:$true] %s2374
          %2377 = dma.vmem_to_hbm [thread:$0]  %s2375, 128, %s2372, %s2361
        $region88: #{tpu_custom_call.1} parent=51 // pred_fallthru
          _
      $region52: #{tpu_custom_call.1} parent=5 // pred_fallthru
        _
      %p2378 = scmp.le.s32.totalorder 2, %s29
      // Predicated region
      $region89: #{tpu_custom_call.1} parent=5 // pred_check
        %p2379 = pneg %p2378
      $region90: #{tpu_custom_call.1} parent=5 // pred_check_branch
        %2381 = sbr.rel (%p2379) target = $region92
      $region91: #{tpu_custom_call.1} parent=5 // pred_region
        %s2382 = ssub.s32 %s29, 2
        // Predicated region
        $region93: #{tpu_custom_call.1} parent=91 // pred_check
          %p2383 = pneg %p278
        $region94: #{tpu_custom_call.1} parent=91 // pred_check_branch
          %2385 = sbr.rel (%p2383) target = $region96
        $region95: #{tpu_custom_call.1} parent=91 // pred_region
          %s2386 = sand.u32 %s263, 1
          %s2387 = scalar_lea.sflag [#allocation4], %s2386
          %s2388 = sand.u32 %s263, 1
          %s2389 = smul.addr %s2388, 8
          %s2390 = scalar_lea.vmem [#allocation14], %s2389
          %2391 = dma.done %s2387, 128
        $region96: #{tpu_custom_call.1} parent=91 // pred_fallthru
          _
      $region92: #{tpu_custom_call.1} parent=5 // pred_fallthru
        _
    $region6: #{tpu_custom_call.1} parent=1 // loop_footer
      %s33 = sadd.s32 1, %s29
    $region7: #{tpu_custom_call.1} parent=1 // loop_footer_branch
      %28 = sbr.rel target = $region3
    $region8: #{tpu_custom_call.1} parent=1 // loop_exit
      _
    %2392 = vsyncpa [#allocation3], 1
    %s2393 = scalar_lea.sflag [#allocation3], 1
    %2394 = vsyncpa %s2393, 1
    %2395 = vsyncpa [#allocation6], 1
    %s2396 = scalar_lea.sflag [#allocation6], 1
    %2397 = vsyncpa %s2396, 1
    %2398 = vsyncpa [#allocation9], 1
    %s2399 = scalar_lea.sflag [#allocation9], 1
    %2400 = vsyncpa %s2399, 1
    %2401 = vsyncpa [#allocation12], 1
    %s2402 = scalar_lea.sflag [#allocation12], 1
    %2403 = vsyncpa %s2402, 1
    %2404 = vsyncpa [#allocation4], 1
    %s2405 = scalar_lea.sflag [#allocation4], 1
    %2406 = vsyncpa %s2405, 1

</llo_original>
